<compile_context>
chip_gen: v6e
topology: v6e:2x2x1
jax: 0.10.0
libtpu: 0.0.40
codegen_flags: <defaults>
</compile_context>

<pallas_src>
import functools

import jax
import jax.numpy as jnp
from jax.experimental import pallas as pl
from jax.experimental.pallas import tpu as pltpu

LANE = 128
SUBLANE = 8


# ----------------------------------------------------------------------------
# Fused kernel: augmentation + merged student/teacher classifier + CE +
#               analytic (algebraic) gradient w.r.t. the aug magnitudes.
# ----------------------------------------------------------------------------
def _fused_aug_loss_grad_kernel(params_ref, xo_ref, w_ref, b_ref, oh_ref,
                                outx_ref, part_ref,
                                loss_acc, gc_acc, gb_acc, *, inv_n):
    i = pl.program_id(1)                       # batch-tile index (reduction axis)

    cmag = params_ref[0]                       # Contrast.magnitude
    bmag = params_ref[1]                       # Brightness.magnitude

    xo = xo_ref[...]                           # (TN, D) original images, f32
    pre = cmag * xo + (bmag - 1.0)             # pre-clip augmented value
    xa = jnp.clip(pre, 0.0, 1.0)               # x_aug

    # Write concat([x_aug, original_x], axis=0) directly (top / bottom half of (2, N, D)).
    outx_ref[0] = xa
    outx_ref[1] = xo

    w = w_ref[...]                             # (D, 2*CPAD) bf16, resident
    bias = b_ref[...]                          # (1, 2*CPAD) f32, -1e9 on padded classes
    oh = oh_ref[...]                           # (TN, CPAD) one-hot (zero on padded classes)
    cpad = oh_ref.shape[1]

    # ---- forward: one bf16 MXU pass over x_aug ------------------------------------
    logits = jnp.dot(xa.astype(jnp.bfloat16), w,
                     preferred_element_type=jnp.float32) + bias          # (TN, 2*CPAD)

    def ce_row_and_probs(lg):                  # stable log-sum-exp, f32
        m = jnp.max(lg, axis=-1, keepdims=True)
        z = lg - m
        lse = jnp.log(jnp.sum(jnp.exp(z), axis=-1, keepdims=True))
        logp = z - lse
        # reduce over batch rows (sublanes) only; the lane reduction happens in the wrapper
        return -jnp.sum(oh * logp, axis=0, keepdims=True), jnp.exp(logp)

    ce_s_row, p_s = ce_row_and_probs(logits[:, :cpad])                   # student bank
    ce_t_row, p_t = ce_row_and_probs(logits[:, cpad:])                   # teacher bank
    loss_row = (ce_t_row - ce_s_row) * inv_n   # alpha=1, beta=1, batch mean (lane-partial)

    # ---- algebraic backward: grad_c = sum(g*((mask*x)@W)), grad_b = sum(g*(mask@W)) ----
    # clamp backward passes gradient where 0 <= pre-clip <= 1 (inclusive, torch.clamp).
    inb = jnp.logical_and(pre >= 0.0, pre <= 1.0)
    mxo = jnp.where(inb, xo, 0.0).astype(jnp.bfloat16)                   # mask * x_original
    mone = jnp.where(inb, 1.0, 0.0).astype(jnp.bfloat16)                 # mask
    m1 = jnp.dot(mxo, w, preferred_element_type=jnp.float32)             # (TN, 2*CPAD)
    m2 = jnp.dot(mone, w, preferred_element_type=jnp.float32)            # (TN, 2*CPAD)

    g_s = oh - p_s                             # = -(p_s - oh): d(sum loss)/d logits_student
    g_t = p_t - oh                             # d(sum loss)/d logits_teacher
    gc_row = (jnp.sum(g_s * m1[:, :cpad], axis=0, keepdims=True) +
              jnp.sum(g_t * m1[:, cpad:], axis=0, keepdims=True)) * inv_n
    gb_row = (jnp.sum(g_s * m2[:, :cpad], axis=0, keepdims=True) +
              jnp.sum(g_t * m2[:, cpad:], axis=0, keepdims=True)) * inv_n

    @pl.when(i == 0)
    def _():
        loss_acc[...] = jnp.zeros_like(loss_acc)
        gc_acc[...] = jnp.zeros_like(gc_acc)
        gb_acc[...] = jnp.zeros_like(gb_acc)

    loss_acc[...] += loss_row
    gc_acc[...] += gc_row
    gb_acc[...] += gb_row

    # single lane-dense partials write per core, hoisted out of the hot loop
    @pl.when(i == pl.num_programs(1) - 1)
    def _():
        part_ref[0] = jnp.concatenate([loss_acc[...], gc_acc[...], gb_acc[...]], axis=0)


# ----------------------------------------------------------------------------
# Generation-aware VMEM budget + tile selection.
# ----------------------------------------------------------------------------
def _vmem_limit_bytes():
    phys = 64 * 1024 * 1024                    # conservative fallback (v7x per-TC)
    try:
        phys = int(pltpu.get_tpu_info().vmem_capacity_bytes)
    except Exception:
        pass
    # 64 MiB scoped on 128-MiB-VMEM chips (v5e/v6e), 32 MiB on 64-MiB chips (v7x).
    return (64 if phys >= 128 * 1024 * 1024 else 32) * 1024 * 1024


def _pick_tiles(n, d, vmem_limit):
    """Choose (batch tile TN, core splits NC, tiles per core NB) for the (N, D) batch."""
    if n % SUBLANE != 0:
        # tiny / ragged batch: single whole-batch tile on one core.
        return n, 1, 1
    # working set ~ 48 B/elem of the (TN, D) tile:
    #   double-buffered xo input (8) + double-buffered (2,TN,D) output (16) + f32/bf16 temps (~20)
    budget = (vmem_limit * 2) // 3
    cap = max(SUBLANE, budget // (48 * d))
    tn = SUBLANE
    for t in (512, 256, 128, 64, 32, 16, 8):
        if t <= cap and n % t == 0:
            tn = t
            break
    tiles = n // tn
    nc = 2 if tiles % 2 == 0 else 1            # leading "parallel" core-split axis
    return tn, nc, tiles // nc


def fused_aug_loss_grad(x_nchw, onehot, aug_params, ws, bs, wt, bt):
    """Returns (concat([x_aug, x], 0) in NCHW, loss, dloss/dcontrast, dloss/dbrightness)."""
    n, c, h, w = x_nchw.shape
    d = c * h * w
    ncls = ws.shape[1]
    cpad = max(LANE, ((ncls + LANE - 1) // LANE) * LANE)     # each head in its own lane bank
    dpad = ((d + LANE - 1) // LANE) * LANE                   # lane-dense image feature dim

    xo = x_nchw.reshape(n, d)
    if dpad != d:
        xo = jnp.pad(xo, ((0, 0), (0, dpad - d)))            # zero W rows => transparent

    # Lane-pad each classifier head; -1e9 bias removes the padded classes from softmax/CE.
    def pad_head(wh, bh):
        wp = jnp.zeros((dpad, cpad), jnp.float32).at[:d, :ncls].set(wh)
        bp = jnp.full((1, cpad), -1e9, jnp.float32).at[:, :ncls].set(bh)
        return wp, bp

    ws_p, bs_p = pad_head(ws, bs)
    wt_p, bt_p = pad_head(wt, bt)
    w_cat = jnp.concatenate([ws_p, wt_p], axis=1).astype(jnp.bfloat16)   # (Dp, 2*CPAD) bf16
    b_cat = jnp.concatenate([bs_p, bt_p], axis=1)                        # (1, 2*CPAD) f32

    oh = onehot
    if oh.shape[1] != cpad:
        oh = jnp.pad(oh, ((0, 0), (0, cpad - oh.shape[1])))

    vmem_limit = _vmem_limit_bytes()
    tn, nc, nb = _pick_tiles(n, dpad, vmem_limit)
    kernel = functools.partial(_fused_aug_loss_grad_kernel, inv_n=1.0 / n)

    out_x, partials = pl.pallas_call(
        kernel,
        out_shape=(jax.ShapeDtypeStruct((2, n, dpad), jnp.float32),
                   jax.ShapeDtypeStruct((nc, 3, LANE), jnp.float32)),
        grid=(nc, nb),
        in_specs=[
            pl.BlockSpec(memory_space=pltpu.MemorySpace.SMEM),               # aug magnitudes
            pl.BlockSpec((tn, dpad), lambda ci, i: (ci * nb + i, 0)),        # original tile
            pl.BlockSpec((dpad, 2 * cpad), lambda ci, i: (0, 0)),            # W_cat (resident)
            pl.BlockSpec((1, 2 * cpad), lambda ci, i: (0, 0)),               # b_cat (resident)
            pl.BlockSpec((tn, cpad), lambda ci, i: (ci * nb + i, 0)),        # onehot tile
        ],
        out_specs=(
            pl.BlockSpec((2, tn, dpad), lambda ci, i: (0, ci * nb + i, 0)),  # [x_aug ; x]
            pl.BlockSpec((1, 3, LANE), lambda ci, i: (ci, 0, 0)),            # per-core partials
        ),
        scratch_shapes=[pltpu.VMEM((1, LANE), jnp.float32)] * 3,             # loss/gc/gb rows
        compiler_params=pltpu.CompilerParams(
            dimension_semantics=("parallel", "arbitrary"),
            vmem_limit_bytes=vmem_limit),
    )(aug_params, xo, w_cat, b_cat, oh)

    parts = jnp.sum(partials, axis=(0, 2))                   # reduce cores + lanes -> (3,)
    if dpad != d:
        out_x = out_x[:, :, :d]
    out_x = out_x.reshape(2 * n, c, h, w)                    # == concat([x_aug, x], axis=0)
    return out_x, parts[0], parts[1], parts[2]


# ----------------------------------------------------------------------------
# Glue: Adam step (lr=1e-5) on the aug magnitudes + clamp() as in the module.
# ----------------------------------------------------------------------------
def adam_clamp_update(params, grads, m, v, t, lr=1e-5, b1=0.9, b2=0.999, eps=1e-8):
    t = t + 1
    m = b1 * m + (1.0 - b1) * grads
    v = b2 * v + (1.0 - b2) * grads * grads
    mhat = m / (1.0 - b1 ** t.astype(jnp.float32))
    vhat = v / (1.0 - b2 ** t.astype(jnp.float32))
    new = params - lr * mhat / (jnp.sqrt(vhat) + eps)
    # clamp(): Contrast / Brightness magnitude_range -> [0.1, 1.9]
    new = jnp.clip(new, 0.1, 1.9)
    return new, m, v, t


@functools.partial(jax.jit, static_argnames=("num_classes", "iter_step", "lr"))
def differentiable_auto_aug_forward(x, y, aug_params, adam_m, adam_v, adam_t,
                                    ws, bs, wt, bt, *,
                                    num_classes=10, iter_step=1, lr=1e-5):
    assert iter_step >= 1
    original_y = y
    onehot = jax.nn.one_hot(y, num_classes, dtype=jnp.float32)

    out_x = None
    loss = jnp.float32(0.0)
    for _ in range(iter_step):                      # config['iter_step'] == 1
        # Fused Pallas kernel: aug + loss + grads + concat output (aug of ORIGINAL x each iter).
        out_x, loss, gc, gb = fused_aug_loss_grad(x, onehot, aug_params, ws, bs, wt, bt)
        grads = jnp.stack([gc, gb])
        aug_params, adam_m, adam_v, adam_t = adam_clamp_update(
            aug_params, grads, adam_m, adam_v, adam_t, lr=lr)

    out_y = jnp.concatenate([y, original_y], axis=0)
    return out_x, out_y, aug_params, adam_m, adam_v, adam_t, loss


if __name__ == "__main__":
    key = jax.random.PRNGKey(0)
    k1, k2, k3, k4 = jax.random.split(key, 4)

    N, C, H, W = 2, 4, 16, 16
    NUM_CLASSES = 10
    D = C * H * W

    x = jax.random.uniform(k1, (N, C, H, W), dtype=jnp.float32)          # images in [0, 1)
    y = jax.random.randint(k2, (N,), 0, NUM_CLASSES, dtype=jnp.int32)    # labels

    # deterministic stand-ins for the injected student / teacher nn.Modules
    ws = 0.02 * jax.random.normal(k3, (D, NUM_CLASSES), jnp.float32)
    bs = jnp.zeros((1, NUM_CLASSES), jnp.float32)
    wt = 0.02 * jax.random.normal(k4, (D, NUM_CLASSES), jnp.float32)
    bt = jnp.zeros((1, NUM_CLASSES), jnp.float32)

    # learnable aug magnitudes: [Contrast.magnitude, Brightness.magnitude]
    aug_params = jnp.array([1.2, 1.1], jnp.float32)
    adam_m = jnp.zeros_like(aug_params)
    adam_v = jnp.zeros_like(aug_params)
    adam_t = jnp.array(0, jnp.int32)

    out_x, out_y, new_params, m, v, t, loss = differentiable_auto_aug_forward(
        x, y, aug_params, adam_m, adam_v, adam_t, ws, bs, wt, bt,
        num_classes=NUM_CLASSES, iter_step=1, lr=1e-5)
    jax.block_until_ready((out_x, out_y, new_params, loss))

    # shape / semantics checks
    assert out_x.shape == (2 * N, C, H, W) and out_x.dtype == jnp.float32
    assert out_y.shape == (2 * N,)
    # top half = aug with the pre-update magnitudes, bottom half = untouched original x
    x_aug_ref = jnp.clip(aug_params[0] * x + (aug_params[1] - 1.0), 0.0, 1.0)
    assert bool(jnp.allclose(out_x[:N], x_aug_ref, atol=1e-5))
    assert bool(jnp.allclose(out_x[N:], x, atol=1e-6))
    assert bool(jnp.all((new_params >= 0.1) & (new_params <= 1.9)))
    assert bool(jnp.isfinite(loss))
    print("KERNEL_OK")
</pallas_src>

<mosaic_0001>
module attributes {stable_mosaic.version = 11 : i64} {
  func.func @_fused_aug_loss_grad_kernel(%arg0: i32, %arg1: i32, %arg2: memref<2xf32, #tpu.memory_space<smem>>, %arg3: memref<2x1024xf32, #tpu.memory_space<vmem>>, %arg4: memref<1024x256xbf16, #tpu.memory_space<vmem>>, %arg5: memref<1x256xf32, #tpu.memory_space<vmem>>, %arg6: memref<2x128xf32, #tpu.memory_space<vmem>>, %arg7: memref<2x2x1024xf32, #tpu.memory_space<vmem>>, %arg8: memref<1x3x128xf32, #tpu.memory_space<vmem>>, %arg9: memref<1x128xf32, #tpu.memory_space<vmem>>, %arg10: memref<1x128xf32, #tpu.memory_space<vmem>>, %arg11: memref<1x128xf32, #tpu.memory_space<vmem>>) attributes {dimension_semantics = [#tpu.dimension_semantics<parallel>, #tpu.dimension_semantics<arbitrary>], iteration_bounds = array<i64: 1, 1>, scalar_prefetch = 0 : i64, scratch_operands = 3 : i64, tpu.core_type = #tpu.core_type<tc>, window_params = [{transform_indices = @transform_0, window_bounds = array<i64: 2>}, {transform_indices = @transform_1, window_bounds = array<i64: 2, 1024>}, {pipeline_mode = #tpu.pipeline_mode<synchronous>, transform_indices = @transform_2, window_bounds = array<i64: 1024, 256>}, {pipeline_mode = #tpu.pipeline_mode<synchronous>, transform_indices = @transform_3, window_bounds = array<i64: 1, 256>}, {transform_indices = @transform_4, window_bounds = array<i64: 2, 128>}, {transform_indices = @transform_5, window_bounds = array<i64: 2, 2, 1024>}, {transform_indices = @transform_6, window_bounds = array<i64: 1, 3, 128>}]} {
    %c0 = arith.constant 0 : index
    %0 = memref.load %arg2[%c0] : memref<2xf32, #tpu.memory_space<smem>>
    %c1 = arith.constant 1 : index
    %1 = memref.load %arg2[%c1] : memref<2xf32, #tpu.memory_space<smem>>
    %c0_0 = arith.constant 0 : index
    %c0_1 = arith.constant 0 : index
    %2 = vector.load %arg3[%c0_0, %c0_1] : memref<2x1024xf32, #tpu.memory_space<vmem>>, vector<2x1024xf32>
    %3 = vector.broadcast %0 : f32 to vector<2x1024xf32>
    %4 = arith.mulf %3, %2 : vector<2x1024xf32>
    %cst = arith.constant 1.000000e+00 : f32
    %5 = arith.subf %1, %cst : f32
    %6 = vector.broadcast %5 : f32 to vector<2x1024xf32>
    %7 = arith.addf %4, %6 : vector<2x1024xf32>
    %cst_2 = arith.constant 0.000000e+00 : f32
    %cst_3 = arith.constant 1.000000e+00 : f32
    %8 = vector.broadcast %cst_2 : f32 to vector<2x1024xf32>
    %9 = arith.maximumf %8, %7 : vector<2x1024xf32>
    %10 = vector.broadcast %cst_3 : f32 to vector<2x1024xf32>
    %11 = arith.minimumf %10, %9 : vector<2x1024xf32>
    %c0_4 = arith.constant 0 : index
    %c0_5 = arith.constant 0 : index
    %c0_6 = arith.constant 0 : index
    %12 = vector.load %arg7[%c0_4, %c0_5, %c0_6] : memref<2x2x1024xf32, #tpu.memory_space<vmem>>, vector<1x2x1024xf32>
    %13 = vector.shape_cast %12 : vector<1x2x1024xf32> to vector<2x1024xf32>
    %14 = vector.shape_cast %11 : vector<2x1024xf32> to vector<1x2x1024xf32>
    tpu.vector_store %arg7[%c0_4, %c0_5, %c0_6], %14 {strides = array<i32>} : memref<2x2x1024xf32, #tpu.memory_space<vmem>>, vector<1x2x1024xf32>,
    %c1_7 = arith.constant 1 : index
    %c0_8 = arith.constant 0 : index
    %c0_9 = arith.constant 0 : index
    %15 = vector.load %arg7[%c1_7, %c0_8, %c0_9] : memref<2x2x1024xf32, #tpu.memory_space<vmem>>, vector<1x2x1024xf32>
    %16 = vector.shape_cast %15 : vector<1x2x1024xf32> to vector<2x1024xf32>
    %17 = vector.shape_cast %2 : vector<2x1024xf32> to vector<1x2x1024xf32>
    tpu.vector_store %arg7[%c1_7, %c0_8, %c0_9], %17 {strides = array<i32>} : memref<2x2x1024xf32, #tpu.memory_space<vmem>>, vector<1x2x1024xf32>,
    %c0_10 = arith.constant 0 : index
    %c0_11 = arith.constant 0 : index
    %18 = vector.load %arg4[%c0_10, %c0_11] : memref<1024x256xbf16, #tpu.memory_space<vmem>>, vector<1024x256xbf16>
    %c0_12 = arith.constant 0 : index
    %c0_13 = arith.constant 0 : index
    %19 = vector.load %arg5[%c0_12, %c0_13] : memref<1x256xf32, #tpu.memory_space<vmem>>, vector<1x256xf32>
    %c0_14 = arith.constant 0 : index
    %c0_15 = arith.constant 0 : index
    %20 = vector.load %arg6[%c0_14, %c0_15] : memref<2x128xf32, #tpu.memory_space<vmem>>, vector<2x128xf32>
    %21 = arith.truncf %11 : vector<2x1024xf32> to vector<2x1024xbf16>
    %cst_16 = arith.constant dense<0.000000e+00> : vector<2x256xf32>
    %22 = tpu.matmul %21, %18, %cst_16 {dimension_numbers = #tpu.dot_dimension_numbers<[1], [0], [0], [1], [0, 0, 1, 1], [], []>} : vector<2x1024xbf16>, vector<1024x256xbf16>, vector<2x256xf32> -> vector<2x256xf32>
    %23 = vector.broadcast %19 : vector<1x256xf32> to vector<2x256xf32>
    %24 = arith.addf %22, %23 : vector<2x256xf32>
    %25 = vector.extract_strided_slice %24 {offsets = [0, 0], sizes = [2, 128], strides = [1, 1]} : vector<2x256xf32> to vector<2x128xf32>
    %cst_17 = arith.constant dense<0xFF800000> : vector<2xf32>
    %26 = vector.multi_reduction <maximumf>, %25, %cst_17 [1] : vector<2x128xf32> to vector<2xf32>
    %27 = vector.shape_cast %26 : vector<2xf32> to vector<2x1xf32>
    %28 = vector.broadcast %27 : vector<2x1xf32> to vector<2x128xf32>
    %29 = arith.subf %25, %28 : vector<2x128xf32>
    %30 = math.exp %29 : vector<2x128xf32>
    %cst_18 = arith.constant dense<0.000000e+00> : vector<2xf32>
    %31 = vector.multi_reduction <add>, %30, %cst_18 [1] : vector<2x128xf32> to vector<2xf32>
    %32 = vector.shape_cast %31 : vector<2xf32> to vector<2x1xf32>
    %33 = math.log %32 : vector<2x1xf32>
    %34 = vector.broadcast %33 : vector<2x1xf32> to vector<2x128xf32>
    %35 = arith.subf %29, %34 : vector<2x128xf32>
    %36 = arith.mulf %20, %35 : vector<2x128xf32>
    %cst_19 = arith.constant dense<0.000000e+00> : vector<128xf32>
    %37 = vector.multi_reduction <add>, %36, %cst_19 [0] : vector<2x128xf32> to vector<128xf32>
    %38 = vector.shape_cast %37 : vector<128xf32> to vector<1x128xf32>
    %cst_20 = arith.constant 0.000000e+00 : f32
    %39 = vector.broadcast %cst_20 : f32 to vector<1x128xf32>
    %40 = arith.subf %39, %38 : vector<1x128xf32>
    %41 = math.exp %35 : vector<2x128xf32>
    %42 = vector.extract_strided_slice %24 {offsets = [0, 128], sizes = [2, 128], strides = [1, 1]} : vector<2x256xf32> to vector<2x128xf32>
    %cst_21 = arith.constant dense<0xFF800000> : vector<2xf32>
    %43 = vector.multi_reduction <maximumf>, %42, %cst_21 [1] : vector<2x128xf32> to vector<2xf32>
    %44 = vector.shape_cast %43 : vector<2xf32> to vector<2x1xf32>
    %45 = vector.broadcast %44 : vector<2x1xf32> to vector<2x128xf32>
    %46 = arith.subf %42, %45 : vector<2x128xf32>
    %47 = math.exp %46 : vector<2x128xf32>
    %cst_22 = arith.constant dense<0.000000e+00> : vector<2xf32>
    %48 = vector.multi_reduction <add>, %47, %cst_22 [1] : vector<2x128xf32> to vector<2xf32>
    %49 = vector.shape_cast %48 : vector<2xf32> to vector<2x1xf32>
    %50 = math.log %49 : vector<2x1xf32>
    %51 = vector.broadcast %50 : vector<2x1xf32> to vector<2x128xf32>
    %52 = arith.subf %46, %51 : vector<2x128xf32>
    %53 = arith.mulf %20, %52 : vector<2x128xf32>
    %cst_23 = arith.constant dense<0.000000e+00> : vector<128xf32>
    %54 = vector.multi_reduction <add>, %53, %cst_23 [0] : vector<2x128xf32> to vector<128xf32>
    %55 = vector.shape_cast %54 : vector<128xf32> to vector<1x128xf32>
    %cst_24 = arith.constant 0.000000e+00 : f32
    %56 = vector.broadcast %cst_24 : f32 to vector<1x128xf32>
    %57 = arith.subf %56, %55 : vector<1x128xf32>
    %58 = math.exp %52 : vector<2x128xf32>
    %59 = arith.subf %57, %40 : vector<1x128xf32>
    %cst_25 = arith.constant 5.000000e-01 : f32
    %60 = vector.broadcast %cst_25 : f32 to vector<1x128xf32>
    %61 = arith.mulf %59, %60 : vector<1x128xf32>
    %cst_26 = arith.constant 0.000000e+00 : f32
    %62 = vector.broadcast %cst_26 : f32 to vector<2x1024xf32>
    %63 = arith.cmpf oge, %7, %62 : vector<2x1024xf32>
    %cst_27 = arith.constant 1.000000e+00 : f32
    %64 = vector.broadcast %cst_27 : f32 to vector<2x1024xf32>
    %65 = arith.cmpf ole, %7, %64 : vector<2x1024xf32>
    %66 = arith.andi %63, %65 : vector<2x1024xi1>
    %cst_28 = arith.constant 0.000000e+00 : f32
    %67 = vector.broadcast %cst_28 : f32 to vector<2x1024xf32>
    %68 = arith.select %66, %2, %67 : vector<2x1024xi1>, vector<2x1024xf32>
    %69 = arith.truncf %68 : vector<2x1024xf32> to vector<2x1024xbf16>
    %cst_29 = arith.constant 1.000000e+00 : f32
    %cst_30 = arith.constant 0.000000e+00 : f32
    %70 = vector.broadcast %cst_29 : f32 to vector<2x1024xf32>
    %71 = vector.broadcast %cst_30 : f32 to vector<2x1024xf32>
    %72 = arith.select %66, %70, %71 : vector<2x1024xi1>, vector<2x1024xf32>
    %73 = arith.truncf %72 : vector<2x1024xf32> to vector<2x1024xbf16>
    %cst_31 = arith.constant dense<0.000000e+00> : vector<2x256xf32>
    %74 = tpu.matmul %69, %18, %cst_31 {dimension_numbers = #tpu.dot_dimension_numbers<[1], [0], [0], [1], [0, 0, 1, 1], [], []>} : vector<2x1024xbf16>, vector<1024x256xbf16>, vector<2x256xf32> -> vector<2x256xf32>
    %cst_32 = arith.constant dense<0.000000e+00> : vector<2x256xf32>
    %75 = tpu.matmul %73, %18, %cst_32 {dimension_numbers = #tpu.dot_dimension_numbers<[1], [0], [0], [1], [0, 0, 1, 1], [], []>} : vector<2x1024xbf16>, vector<1024x256xbf16>, vector<2x256xf32> -> vector<2x256xf32>
    %76 = arith.subf %20, %41 : vector<2x128xf32>
    %77 = arith.subf %58, %20 : vector<2x128xf32>
    %78 = vector.extract_strided_slice %74 {offsets = [0, 0], sizes = [2, 128], strides = [1, 1]} : vector<2x256xf32> to vector<2x128xf32>
    %79 = arith.mulf %76, %78 : vector<2x128xf32>
    %cst_33 = arith.constant dense<0.000000e+00> : vector<128xf32>
    %80 = vector.multi_reduction <add>, %79, %cst_33 [0] : vector<2x128xf32> to vector<128xf32>
    %81 = vector.shape_cast %80 : vector<128xf32> to vector<1x128xf32>
    %82 = vector.extract_strided_slice %74 {offsets = [0, 128], sizes = [2, 128], strides = [1, 1]} : vector<2x256xf32> to vector<2x128xf32>
    %83 = arith.mulf %77, %82 : vector<2x128xf32>
    %cst_34 = arith.constant dense<0.000000e+00> : vector<128xf32>
    %84 = vector.multi_reduction <add>, %83, %cst_34 [0] : vector<2x128xf32> to vector<128xf32>
    %85 = vector.shape_cast %84 : vector<128xf32> to vector<1x128xf32>
    %86 = arith.addf %81, %85 : vector<1x128xf32>
    %cst_35 = arith.constant 5.000000e-01 : f32
    %87 = vector.broadcast %cst_35 : f32 to vector<1x128xf32>
    %88 = arith.mulf %86, %87 : vector<1x128xf32>
    %89 = vector.extract_strided_slice %75 {offsets = [0, 0], sizes = [2, 128], strides = [1, 1]} : vector<2x256xf32> to vector<2x128xf32>
    %90 = arith.mulf %76, %89 : vector<2x128xf32>
    %cst_36 = arith.constant dense<0.000000e+00> : vector<128xf32>
    %91 = vector.multi_reduction <add>, %90, %cst_36 [0] : vector<2x128xf32> to vector<128xf32>
    %92 = vector.shape_cast %91 : vector<128xf32> to vector<1x128xf32>
    %93 = vector.extract_strided_slice %75 {offsets = [0, 128], sizes = [2, 128], strides = [1, 1]} : vector<2x256xf32> to vector<2x128xf32>
    %94 = arith.mulf %77, %93 : vector<2x128xf32>
    %cst_37 = arith.constant dense<0.000000e+00> : vector<128xf32>
    %95 = vector.multi_reduction <add>, %94, %cst_37 [0] : vector<2x128xf32> to vector<128xf32>
    %96 = vector.shape_cast %95 : vector<128xf32> to vector<1x128xf32>
    %97 = arith.addf %92, %96 : vector<1x128xf32>
    %cst_38 = arith.constant 5.000000e-01 : f32
    %98 = vector.broadcast %cst_38 : f32 to vector<1x128xf32>
    %99 = arith.mulf %97, %98 : vector<1x128xf32>
    %c0_i32 = arith.constant 0 : i32
    %100 = arith.cmpi eq, %arg1, %c0_i32 : i32
    %101 = arith.extui %100 : i1 to i32
    %c0_i32_39 = arith.constant 0 : i32
    %102 = arith.cmpi ne, %101, %c0_i32_39 : i32
    scf.if %102 {
      %cst_54 = arith.constant 0.000000e+00 : f32
      %115 = vector.broadcast %cst_54 : f32 to vector<1x128xf32>
      %c0_55 = arith.constant 0 : index
      %c0_56 = arith.constant 0 : index
      %116 = vector.load %arg9[%c0_55, %c0_56] : memref<1x128xf32, #tpu.memory_space<vmem>>, vector<1x128xf32>
      tpu.vector_store %arg9[%c0_55, %c0_56], %115 {strides = array<i32>} : memref<1x128xf32, #tpu.memory_space<vmem>>, vector<1x128xf32>,
      %cst_57 = arith.constant 0.000000e+00 : f32
      %117 = vector.broadcast %cst_57 : f32 to vector<1x128xf32>
      %c0_58 = arith.constant 0 : index
      %c0_59 = arith.constant 0 : index
      %118 = vector.load %arg10[%c0_58, %c0_59] : memref<1x128xf32, #tpu.memory_space<vmem>>, vector<1x128xf32>
      tpu.vector_store %arg10[%c0_58, %c0_59], %117 {strides = array<i32>} : memref<1x128xf32, #tpu.memory_space<vmem>>, vector<1x128xf32>,
      %cst_60 = arith.constant 0.000000e+00 : f32
      %119 = vector.broadcast %cst_60 : f32 to vector<1x128xf32>
      %c0_61 = arith.constant 0 : index
      %c0_62 = arith.constant 0 : index
      %120 = vector.load %arg11[%c0_61, %c0_62] : memref<1x128xf32, #tpu.memory_space<vmem>>, vector<1x128xf32>
      tpu.vector_store %arg11[%c0_61, %c0_62], %119 {strides = array<i32>} : memref<1x128xf32, #tpu.memory_space<vmem>>, vector<1x128xf32>,
    } else {
    }
    %c0_40 = arith.constant 0 : index
    %c0_41 = arith.constant 0 : index
    %103 = vector.load %arg9[%c0_40, %c0_41] : memref<1x128xf32, #tpu.memory_space<vmem>>, vector<1x128xf32>
    %104 = arith.addf %103, %61 : vector<1x128xf32>
    %c0_42 = arith.constant 0 : index
    %c0_43 = arith.constant 0 : index
    %105 = vector.load %arg9[%c0_42, %c0_43] : memref<1x128xf32, #tpu.memory_space<vmem>>, vector<1x128xf32>
    tpu.vector_store %arg9[%c0_42, %c0_43], %104 {strides = array<i32>} : memref<1x128xf32, #tpu.memory_space<vmem>>, vector<1x128xf32>,
    %c0_44 = arith.constant 0 : index
    %c0_45 = arith.constant 0 : index
    %106 = vector.load %arg10[%c0_44, %c0_45] : memref<1x128xf32, #tpu.memory_space<vmem>>, vector<1x128xf32>
    %107 = arith.addf %106, %88 : vector<1x128xf32>
    %c0_46 = arith.constant 0 : index
    %c0_47 = arith.constant 0 : index
    %108 = vector.load %arg10[%c0_46, %c0_47] : memref<1x128xf32, #tpu.memory_space<vmem>>, vector<1x128xf32>
    tpu.vector_store %arg10[%c0_46, %c0_47], %107 {strides = array<i32>} : memref<1x128xf32, #tpu.memory_space<vmem>>, vector<1x128xf32>,
    %c0_48 = arith.constant 0 : index
    %c0_49 = arith.constant 0 : index
    %109 = vector.load %arg11[%c0_48, %c0_49] : memref<1x128xf32, #tpu.memory_space<vmem>>, vector<1x128xf32>
    %110 = arith.addf %109, %99 : vector<1x128xf32>
    %c0_50 = arith.constant 0 : index
    %c0_51 = arith.constant 0 : index
    %111 = vector.load %arg11[%c0_50, %c0_51] : memref<1x128xf32, #tpu.memory_space<vmem>>, vector<1x128xf32>
    tpu.vector_store %arg11[%c0_50, %c0_51], %110 {strides = array<i32>} : memref<1x128xf32, #tpu.memory_space<vmem>>, vector<1x128xf32>,
    %c0_i32_52 = arith.constant 0 : i32
    %112 = arith.cmpi eq, %arg1, %c0_i32_52 : i32
    %113 = arith.extui %112 : i1 to i32
    %c0_i32_53 = arith.constant 0 : i32
    %114 = arith.cmpi ne, %113, %c0_i32_53 : i32
    scf.if %114 {
      %c0_54 = arith.constant 0 : index
      %c0_55 = arith.constant 0 : index
      %115 = vector.load %arg9[%c0_54, %c0_55] : memref<1x128xf32, #tpu.memory_space<vmem>>, vector<1x128xf32>
      %c0_56 = arith.constant 0 : index
      %c0_57 = arith.constant 0 : index
      %116 = vector.load %arg10[%c0_56, %c0_57] : memref<1x128xf32, #tpu.memory_space<vmem>>, vector<1x128xf32>
      %c0_58 = arith.constant 0 : index
      %c0_59 = arith.constant 0 : index
      %117 = vector.load %arg11[%c0_58, %c0_59] : memref<1x128xf32, #tpu.memory_space<vmem>>, vector<1x128xf32>
      %118 = tpu.concatenate %115, %116, %117 in 0 : vector<1x128xf32>, vector<1x128xf32>, vector<1x128xf32> -> vector<3x128xf32>
      %c0_60 = arith.constant 0 : index
      %c0_61 = arith.constant 0 : index
      %c0_62 = arith.constant 0 : index
      %119 = vector.load %arg8[%c0_60, %c0_61, %c0_62] : memref<1x3x128xf32, #tpu.memory_space<vmem>>, vector<1x3x128xf32>
      %120 = vector.shape_cast %119 : vector<1x3x128xf32> to vector<3x128xf32>
      %121 = vector.shape_cast %118 : vector<3x128xf32> to vector<1x3x128xf32>
      tpu.vector_store %arg8[%c0_60, %c0_61, %c0_62], %121 {strides = array<i32>} : memref<1x3x128xf32, #tpu.memory_space<vmem>>, vector<1x3x128xf32>,
    } else {
    }
    return
  }
  func.func @transform_0(%arg0: i32, %arg1: i32) -> i32 {
    %c0_i32 = arith.constant 0 : i32
    %c0_i32_0 = arith.constant 0 : i32
    return %c0_i32 : i32
  }
  func.func @transform_1(%arg0: i32, %arg1: i32) -> (i32, i32) {
    %c1_i32 = arith.constant 1 : i32
    %0 = arith.muli %arg0, %c1_i32 : i32
    %1 = arith.addi %0, %arg1 : i32
    %c0_i32 = arith.constant 0 : i32
    %c0_i32_0 = arith.constant 0 : i32
    return %1, %c0_i32 : i32, i32
  }
  func.func @transform_2(%arg0: i32, %arg1: i32) -> (i32, i32) {
    %c0_i32 = arith.constant 0 : i32
    %c0_i32_0 = arith.constant 0 : i32
    %c0_i32_1 = arith.constant 0 : i32
    return %c0_i32, %c0_i32_0 : i32, i32
  }
  func.func @transform_3(%arg0: i32, %arg1: i32) -> (i32, i32) {
    %c0_i32 = arith.constant 0 : i32
    %c0_i32_0 = arith.constant 0 : i32
    %c0_i32_1 = arith.constant 0 : i32
    return %c0_i32, %c0_i32_0 : i32, i32
  }
  func.func @transform_4(%arg0: i32, %arg1: i32) -> (i32, i32) {
    %c1_i32 = arith.constant 1 : i32
    %0 = arith.muli %arg0, %c1_i32 : i32
    %1 = arith.addi %0, %arg1 : i32
    %c0_i32 = arith.constant 0 : i32
    %c0_i32_0 = arith.constant 0 : i32
    return %1, %c0_i32 : i32, i32
  }
  func.func @transform_5(%arg0: i32, %arg1: i32) -> (i32, i32, i32) {
    %c1_i32 = arith.constant 1 : i32
    %0 = arith.muli %arg0, %c1_i32 : i32
    %1 = arith.addi %0, %arg1 : i32
    %c0_i32 = arith.constant 0 : i32
    %c0_i32_0 = arith.constant 0 : i32
    %c0_i32_1 = arith.constant 0 : i32
    return %c0_i32, %1, %c0_i32_0 : i32, i32, i32
  }
  func.func @transform_6(%arg0: i32, %arg1: i32) -> (i32, i32, i32) {
    %c0_i32 = arith.constant 0 : i32
    %c0_i32_0 = arith.constant 0 : i32
    %c0_i32_1 = arith.constant 0 : i32
    return %arg0, %c0_i32, %c0_i32_0 : i32, i32, i32
  }
}

</mosaic_0001>

<llo_original>
// kernel: differentiable_auto_aug_forward.1
$region0: #{differentiable_auto_aug_forward.1}
  #allocation0 [shape = 'u32[]', space=smem, size = 0x4, offset = 0x4, fixed_abs, tag = 'smem constant byte address 0x4 - core index']
  #allocation1 [shape = 'u32[144,128]{1,0:T(1,128)}', space=vmem, size = 0x12000, scoped, tag = 'internal scratch']
  #allocation2 [shape = 'f32[1,128]{1,0:T(1,128)}', space=vmem, size = 0x200, scoped, tag = 'scratch operand']
  #allocation3 [shape = 'f32[1,128]{1,0:T(1,128)}', space=vmem, size = 0x200, scoped, tag = 'scratch operand']
  #allocation4 [shape = 'f32[1,128]{1,0:T(1,128)}', space=vmem, size = 0x200, scoped, tag = 'scratch operand']
  %s0 = inlined_call_operand.vmem [shape: f32[2], index: 0, kind: input, shape index: {}]
  %s1 = inlined_call_operand.vmem [shape: f32[2,1024], index: 1, kind: input, shape index: {}]
  %s2 = inlined_call_operand.vmem [shape: bf16[1024,256], index: 2, kind: input, shape index: {}]
  %s3 = inlined_call_operand.vmem [shape: f32[1,256], index: 3, kind: input, shape index: {}]
  %s4 = inlined_call_operand.vmem [shape: f32[2,128], index: 4, kind: input, shape index: {}]
  %s5 = inlined_call_operand.vmem [shape: f32[2,2,1024], index: 5, kind: output, shape index: {0}]
  %s6 = inlined_call_operand.vmem [shape: f32[1,3,128], index: 6, kind: output, shape index: {1}]
  %7 = xla_tuple %s5, %s6
  %s8 = sld [smem:[#allocation0]]
  $region50: #{differentiable_auto_aug_forward.1} parent=0
    _
  %s10 = ssub.s32 1, %s8
  %s11 = scalar_select 0, %s10, %s8
  $region1: #{differentiable_auto_aug_forward.1} parent=0
    #allocation5 [shape = 'u8[512]{0}', space=smem, size = 0x200, scoped, tag = 'input window, operand 0, single buffered']
    #allocation6 [shape = 's32[1]{0}', space=sflag, size = 0x4, scoped, tag = 'scoped memory for differentiable_auto_aug_forward.1']
    %12 = vsyncpa [#allocation6], 0
    // Predicated region
    $region2: #{differentiable_auto_aug_forward.1} parent=1 // pred_check
      _
    $region3: #{differentiable_auto_aug_forward.1} parent=1 // pred_check_branch
      %14 = sbr.rel (0) target = $region5
    $region4: #{differentiable_auto_aug_forward.1} parent=1 // pred_region
      %s16 = ssub.s32 16, 16
      %17 = vsyncadd [#allocation6], %s16
      %s19 = sshll.u32 %s0, 4
      %s20 = int_to_ptr.vmem [resolvable:$true] %s19
      %22 = dma.vmem_to_smem %s20, 16, [#allocation5], [#allocation6]
    $region5: #{differentiable_auto_aug_forward.1} parent=1 // pred_fallthru
      _
    // Predicated region
    $region6: #{differentiable_auto_aug_forward.1} parent=1 // pred_check
      _
    $region7: #{differentiable_auto_aug_forward.1} parent=1 // pred_check_branch
      %24 = sbr.rel (0) target = $region9
    $region8: #{differentiable_auto_aug_forward.1} parent=1 // pred_region
      %s25 = sadd.s32 0, 0
      %p26 = scmp.lt.s32.totalorder %s25, 0
      %s27 = scalar_select %p26, %s25, 0
      %s28 = smul.addr %s27, 8
      %s29 = smul.addr %s28, 2
      %s30 = scalar_lea.vmem %s1, %s29
      %s31 = sadd.s32 0, 0
    $region9: #{differentiable_auto_aug_forward.1} parent=1 // pred_fallthru
      _
    // Predicated region
    $region10: #{differentiable_auto_aug_forward.1} parent=1 // pred_check
      _
    $region11: #{differentiable_auto_aug_forward.1} parent=1 // pred_check_branch
      %33 = sbr.rel (0) target = $region13
    $region12: #{differentiable_auto_aug_forward.1} parent=1 // pred_region
      _
    $region13: #{differentiable_auto_aug_forward.1} parent=1 // pred_fallthru
      _
    // Predicated region
    $region14: #{differentiable_auto_aug_forward.1} parent=1 // pred_check
      _
    $region15: #{differentiable_auto_aug_forward.1} parent=1 // pred_check_branch
      %35 = sbr.rel (0) target = $region17
    $region16: #{differentiable_auto_aug_forward.1} parent=1 // pred_region
      _
    $region17: #{differentiable_auto_aug_forward.1} parent=1 // pred_fallthru
      _
    // Predicated region
    $region18: #{differentiable_auto_aug_forward.1} parent=1 // pred_check
      _
    $region19: #{differentiable_auto_aug_forward.1} parent=1 // pred_check_branch
      %37 = sbr.rel (0) target = $region21
    $region20: #{differentiable_auto_aug_forward.1} parent=1 // pred_region
      %s38 = sadd.s32 0, 0
      %p39 = scmp.lt.s32.totalorder %s38, 0
      %s40 = scalar_select %p39, %s38, 0
      %s41 = smul.addr %s40, 2
      %s42 = scalar_lea.vmem %s4, %s41
      %s43 = sadd.s32 0, 0
    $region21: #{differentiable_auto_aug_forward.1} parent=1 // pred_fallthru
      _
    // Predicated region
    $region22: #{differentiable_auto_aug_forward.1} parent=1 // pred_check
      _
    $region23: #{differentiable_auto_aug_forward.1} parent=1 // pred_check_branch
      %45 = sbr.rel (0) target = $region25
    $region24: #{differentiable_auto_aug_forward.1} parent=1 // pred_region
      %46 = dma.done [#allocation6], 16
    $region25: #{differentiable_auto_aug_forward.1} parent=1 // pred_fallthru
      _
    %47 = sfence
    %s48 = sadd.s32 0, 0
    %p49 = scmp.lt.s32.totalorder %s48, 0
    %s50 = scalar_select %p49, %s48, 0
    %s51 = smul.addr %s50, 8
    %s52 = smul.addr %s51, 2
    %s53 = scalar_lea.vmem %s1, %s52
    %s54 = sadd.s32 0, 0
    %p55 = scmp.lt.s32.totalorder %s54, 0
    %s56 = scalar_select %p55, %s54, 0
    %s57 = smul.addr %s56, 2
    %s58 = scalar_lea.vmem %s4, %s57
    %s59 = sadd.s32 0, 0
    %p60 = scmp.lt.s32.totalorder %s59, 0
    %s61 = scalar_select %p60, %s59, 0
    %s62 = smul.addr %s61, 8
    %s63 = smul.addr %s62, 2
    %s64 = scalar_lea.vmem %s5, %s63
    %s65 = sadd.s32 0, 0
    %p66 = scmp.lt.s32.totalorder %s65, 0
    %s67 = scalar_select %p66, %s65, 0
    %s68 = smul.addr %s67, 8
    %s69 = smul.addr %s68, 2
    %s70 = scalar_lea.vmem %s1, %s69
    %s71 = sadd.s32 0, 0
    %s72 = sadd.s32 0, 0
    %p73 = scmp.lt.s32.totalorder %s72, 0
    %s74 = scalar_select %p73, %s72, 0
    %s75 = smul.addr %s74, 2
    %s76 = scalar_lea.vmem %s4, %s75
    %s77 = sadd.s32 0, 0
    %s78 = sadd.s32 0, 0
    %p79 = scmp.lt.s32.totalorder %s78, 0
    %s80 = scalar_select %p79, %s78, 0
    %s81 = smul.addr %s80, 8
    %s82 = smul.addr %s81, 2
    %s83 = scalar_lea.vmem %s5, %s82
    %s84 = sadd.s32 0, 0
    %s85 = sld [smem:[#allocation5]]
    %s86 = sld [smem:[#allocation5 + $0x1]]
    %v87 = vld [vmem:[%s70] sm:$0xff]
    %v88 = vld [vmem:[%s70 + $0x8] sm:$0xff]
    %v89 = vstv %s85
    %v90 = vmul.f32 %v89, %v87
    %v91 = vmul.f32 %v89, %v88
    %s92 = ssub.f32 %s86, 1.0
    %v93 = vstv %s92
    %v94 = vadd.f32 %v90, %v93
    %v95 = vadd.f32 %v91, %v93
    %v96 = vmax.f32 %v94, 0.0
    %v97 = vmax.f32 %v95, 0.0
    %v98 = vmin.f32 %v96, 1.0
    %v99 = vmin.f32 %v97, 1.0
    %100 = vst [vmem:[%s83] sm:$0xff] %v98
    %101 = vst [vmem:[%s83 + $0x8] sm:$0xff] %v99
    %s102 = scalar_lea.vmem %s83, 16
    %103 = vst [vmem:[%s102] sm:$0xff] %v87
    %104 = vst [vmem:[%s102 + $0x8] sm:$0xff] %v88
    %v105 = vld [vmem:[%s2] sm:$0xff]
    %v106 = vld [vmem:[%s2 + $0x8] sm:$0xff]
    %v107 = vld [vmem:[%s2 + $0x10] sm:$0xff]
    %v108 = vld [vmem:[%s2 + $0x18] sm:$0xff]
    %v109 = vld [vmem:[%s2 + $0x20] sm:$0xff]
    %v110 = vld [vmem:[%s2 + $0x28] sm:$0xff]
    %v111 = vld [vmem:[%s2 + $0x30] sm:$0xff]
    %v112 = vld [vmem:[%s2 + $0x38] sm:$0xff]
    %v113 = vld [vmem:[%s2 + $0x40] sm:$0xff]
    %v114 = vld [vmem:[%s2 + $0x48] sm:$0xff]
    %v115 = vld [vmem:[%s2 + $0x50] sm:$0xff]
    %v116 = vld [vmem:[%s2 + $0x58] sm:$0xff]
    %v117 = vld [vmem:[%s2 + $0x60] sm:$0xff]
    %v118 = vld [vmem:[%s2 + $0x68] sm:$0xff]
    %v119 = vld [vmem:[%s2 + $0x70] sm:$0xff]
    %v120 = vld [vmem:[%s2 + $0x78] sm:$0xff]
    %v121 = vld [vmem:[%s2 + $0x80] sm:$0xff]
    %v122 = vld [vmem:[%s2 + $0x88] sm:$0xff]
    %v123 = vld [vmem:[%s2 + $0x90] sm:$0xff]
    %v124 = vld [vmem:[%s2 + $0x98] sm:$0xff]
    %v125 = vld [vmem:[%s2 + $0xa0] sm:$0xff]
    %v126 = vld [vmem:[%s2 + $0xa8] sm:$0xff]
    %v127 = vld [vmem:[%s2 + $0xb0] sm:$0xff]
    %v128 = vld [vmem:[%s2 + $0xb8] sm:$0xff]
    %v129 = vld [vmem:[%s2 + $0xc0] sm:$0xff]
    %v130 = vld [vmem:[%s2 + $0xc8] sm:$0xff]
    %v131 = vld [vmem:[%s2 + $0xd0] sm:$0xff]
    %v132 = vld [vmem:[%s2 + $0xd8] sm:$0xff]
    %v133 = vld [vmem:[%s2 + $0xe0] sm:$0xff]
    %v134 = vld [vmem:[%s2 + $0xe8] sm:$0xff]
    %v135 = vld [vmem:[%s2 + $0xf0] sm:$0xff]
    %v136 = vld [vmem:[%s2 + $0xf8] sm:$0xff]
    %v137 = vld [vmem:[%s2 + $0x100] sm:$0xff]
    %v138 = vld [vmem:[%s2 + $0x108] sm:$0xff]
    %v139 = vld [vmem:[%s2 + $0x110] sm:$0xff]
    %v140 = vld [vmem:[%s2 + $0x118] sm:$0xff]
    %v141 = vld [vmem:[%s2 + $0x120] sm:$0xff]
    %v142 = vld [vmem:[%s2 + $0x128] sm:$0xff]
    %v143 = vld [vmem:[%s2 + $0x130] sm:$0xff]
    %v144 = vld [vmem:[%s2 + $0x138] sm:$0xff]
    %v145 = vld [vmem:[%s2 + $0x140] sm:$0xff]
    %v146 = vld [vmem:[%s2 + $0x148] sm:$0xff]
    %v147 = vld [vmem:[%s2 + $0x150] sm:$0xff]
    %v148 = vld [vmem:[%s2 + $0x158] sm:$0xff]
    %v149 = vld [vmem:[%s2 + $0x160] sm:$0xff]
    %v150 = vld [vmem:[%s2 + $0x168] sm:$0xff]
    %v151 = vld [vmem:[%s2 + $0x170] sm:$0xff]
    %v152 = vld [vmem:[%s2 + $0x178] sm:$0xff]
    %v153 = vld [vmem:[%s2 + $0x180] sm:$0xff]
    %v154 = vld [vmem:[%s2 + $0x188] sm:$0xff]
    %v155 = vld [vmem:[%s2 + $0x190] sm:$0xff]
    %v156 = vld [vmem:[%s2 + $0x198] sm:$0xff]
    %v157 = vld [vmem:[%s2 + $0x1a0] sm:$0xff]
    %v158 = vld [vmem:[%s2 + $0x1a8] sm:$0xff]
    %v159 = vld [vmem:[%s2 + $0x1b0] sm:$0xff]
    %v160 = vld [vmem:[%s2 + $0x1b8] sm:$0xff]
    %v161 = vld [vmem:[%s2 + $0x1c0] sm:$0xff]
    %v162 = vld [vmem:[%s2 + $0x1c8] sm:$0xff]
    %v163 = vld [vmem:[%s2 + $0x1d0] sm:$0xff]
    %v164 = vld [vmem:[%s2 + $0x1d8] sm:$0xff]
    %v165 = vld [vmem:[%s2 + $0x1e0] sm:$0xff]
    %v166 = vld [vmem:[%s2 + $0x1e8] sm:$0xff]
    %v167 = vld [vmem:[%s2 + $0x1f0] sm:$0xff]
    %v168 = vld [vmem:[%s2 + $0x1f8] sm:$0xff]
    %v169 = vld [vmem:[%s2 + $0x200] sm:$0xff]
    %v170 = vld [vmem:[%s2 + $0x208] sm:$0xff]
    %v171 = vld [vmem:[%s2 + $0x210] sm:$0xff]
    %v172 = vld [vmem:[%s2 + $0x218] sm:$0xff]
    %v173 = vld [vmem:[%s2 + $0x220] sm:$0xff]
    %v174 = vld [vmem:[%s2 + $0x228] sm:$0xff]
    %v175 = vld [vmem:[%s2 + $0x230] sm:$0xff]
    %v176 = vld [vmem:[%s2 + $0x238] sm:$0xff]
    %v177 = vld [vmem:[%s2 + $0x240] sm:$0xff]
    %v178 = vld [vmem:[%s2 + $0x248] sm:$0xff]
    %v179 = vld [vmem:[%s2 + $0x250] sm:$0xff]
    %v180 = vld [vmem:[%s2 + $0x258] sm:$0xff]
    %v181 = vld [vmem:[%s2 + $0x260] sm:$0xff]
    %v182 = vld [vmem:[%s2 + $0x268] sm:$0xff]
    %v183 = vld [vmem:[%s2 + $0x270] sm:$0xff]
    %v184 = vld [vmem:[%s2 + $0x278] sm:$0xff]
    %v185 = vld [vmem:[%s2 + $0x280] sm:$0xff]
    %v186 = vld [vmem:[%s2 + $0x288] sm:$0xff]
    %v187 = vld [vmem:[%s2 + $0x290] sm:$0xff]
    %v188 = vld [vmem:[%s2 + $0x298] sm:$0xff]
    %v189 = vld [vmem:[%s2 + $0x2a0] sm:$0xff]
    %v190 = vld [vmem:[%s2 + $0x2a8] sm:$0xff]
    %v191 = vld [vmem:[%s2 + $0x2b0] sm:$0xff]
    %v192 = vld [vmem:[%s2 + $0x2b8] sm:$0xff]
    %v193 = vld [vmem:[%s2 + $0x2c0] sm:$0xff]
    %v194 = vld [vmem:[%s2 + $0x2c8] sm:$0xff]
    %v195 = vld [vmem:[%s2 + $0x2d0] sm:$0xff]
    %v196 = vld [vmem:[%s2 + $0x2d8] sm:$0xff]
    %v197 = vld [vmem:[%s2 + $0x2e0] sm:$0xff]
    %v198 = vld [vmem:[%s2 + $0x2e8] sm:$0xff]
    %v199 = vld [vmem:[%s2 + $0x2f0] sm:$0xff]
    %v200 = vld [vmem:[%s2 + $0x2f8] sm:$0xff]
    %v201 = vld [vmem:[%s2 + $0x300] sm:$0xff]
    %v202 = vld [vmem:[%s2 + $0x308] sm:$0xff]
    %v203 = vld [vmem:[%s2 + $0x310] sm:$0xff]
    %v204 = vld [vmem:[%s2 + $0x318] sm:$0xff]
    %v205 = vld [vmem:[%s2 + $0x320] sm:$0xff]
    %v206 = vld [vmem:[%s2 + $0x328] sm:$0xff]
    %v207 = vld [vmem:[%s2 + $0x330] sm:$0xff]
    %v208 = vld [vmem:[%s2 + $0x338] sm:$0xff]
    %v209 = vld [vmem:[%s2 + $0x340] sm:$0xff]
    %v210 = vld [vmem:[%s2 + $0x348] sm:$0xff]
    %v211 = vld [vmem:[%s2 + $0x350] sm:$0xff]
    %v212 = vld [vmem:[%s2 + $0x358] sm:$0xff]
    %v213 = vld [vmem:[%s2 + $0x360] sm:$0xff]
    %v214 = vld [vmem:[%s2 + $0x368] sm:$0xff]
    %v215 = vld [vmem:[%s2 + $0x370] sm:$0xff]
    %v216 = vld [vmem:[%s2 + $0x378] sm:$0xff]
    %v217 = vld [vmem:[%s2 + $0x380] sm:$0xff]
    %v218 = vld [vmem:[%s2 + $0x388] sm:$0xff]
    %v219 = vld [vmem:[%s2 + $0x390] sm:$0xff]
    %v220 = vld [vmem:[%s2 + $0x398] sm:$0xff]
    %v221 = vld [vmem:[%s2 + $0x3a0] sm:$0xff]
    %v222 = vld [vmem:[%s2 + $0x3a8] sm:$0xff]
    %v223 = vld [vmem:[%s2 + $0x3b0] sm:$0xff]
    %v224 = vld [vmem:[%s2 + $0x3b8] sm:$0xff]
    %v225 = vld [vmem:[%s2 + $0x3c0] sm:$0xff]
    %v226 = vld [vmem:[%s2 + $0x3c8] sm:$0xff]
    %v227 = vld [vmem:[%s2 + $0x3d0] sm:$0xff]
    %v228 = vld [vmem:[%s2 + $0x3d8] sm:$0xff]
    %v229 = vld [vmem:[%s2 + $0x3e0] sm:$0xff]
    %v230 = vld [vmem:[%s2 + $0x3e8] sm:$0xff]
    %v231 = vld [vmem:[%s2 + $0x3f0] sm:$0xff]
    %v232 = vld [vmem:[%s2 + $0x3f8] sm:$0xff]
    %v233 = vld [vmem:[%s3] sm:$0x3]
    %v234 = vld [vmem:[%s76] sm:$0x3]
    %v237 = vcombine.high %v98, %v98
    %v239 = vunpack.c.l.s4 1983009808
    %v240 = vunpack.c.0.s8 %v239
    %v241 = vlaneseq
    %v242 = vshrl.u32 %v241, 7
    %v243 = vsub.s32 %v240, %v242
    %v244 = vrot.slane %v98, %v243
    %v246 = vunpack.c.l.s4 1983009808
    %v247 = vunpack.c.0.s8 %v246
    %v248 = vlaneseq
    %v249 = vshrl.u32 %v248, 7
    %v250 = vsub.s32 %v247, %v249
    %v251 = vrot.slane %v237, %v250
    %v252 = vcombine.high %v244, %v244
    %v253 = vcombine.high %v251, %v251
    %v254 = vcombine.high %v99, %v99
    %v256 = vunpack.c.l.s4 1983009808
    %v257 = vunpack.c.0.s8 %v256
    %v258 = vlaneseq
    %v259 = vshrl.u32 %v258, 7
    %v260 = vsub.s32 %v257, %v259
    %v261 = vrot.slane %v99, %v260
    %v263 = vunpack.c.l.s4 1983009808
    %v264 = vunpack.c.0.s8 %v263
    %v265 = vlaneseq
    %v266 = vshrl.u32 %v265, 7
    %v267 = vsub.s32 %v264, %v266
    %v268 = vrot.slane %v254, %v267
    %v269 = vcombine.high %v261, %v261
    %v270 = vcombine.high %v268, %v268
    %v279 = vpack.c.bf16 %v244, %v244
    %v280 = vpack.c.bf16 %v252, %v252
    %v281 = vpack.c.bf16 %v251, %v251
    %v282 = vpack.c.bf16 %v253, %v253
    %v283 = vpack.c.bf16 %v261, %v261
    %v284 = vpack.c.bf16 %v269, %v269
    %v285 = vpack.c.bf16 %v268, %v268
    %v286 = vpack.c.bf16 %v270, %v270
    %v288 = vlaneseq
    %v289 = vshrl.u32 %v288, 7
    %v290 = vsub.s32 0, %v289
    %v291 = vrot.slane %v233, %v290
    %v292 = vlaneseq
    %v293 = vshrl.u32 %v292, 7
    %v294 = vsub.s32 1, %v293
    %v295 = vrot.slane %v233, %v294
    %v426 = vunpack.c.l.b16 %v105
    %v427 = vunpack.c.h.b16 %v105
    %v428 = vunpack.c.l.b16 %v106
    %v429 = vunpack.c.h.b16 %v106
    %v430 = vunpack.c.l.b16 %v107
    %v431 = vunpack.c.h.b16 %v107
    %v432 = vunpack.c.l.b16 %v108
    %v433 = vunpack.c.h.b16 %v108
    %v434 = vunpack.c.l.b16 %v109
    %v435 = vunpack.c.h.b16 %v109
    %v436 = vunpack.c.l.b16 %v110
    %v437 = vunpack.c.h.b16 %v110
    %v438 = vunpack.c.l.b16 %v111
    %v439 = vunpack.c.h.b16 %v111
    %v440 = vunpack.c.l.b16 %v112
    %v441 = vunpack.c.h.b16 %v112
    %v442 = vunpack.c.l.b16 %v113
    %v443 = vunpack.c.h.b16 %v113
    %v444 = vunpack.c.l.b16 %v114
    %v445 = vunpack.c.h.b16 %v114
    %v446 = vunpack.c.l.b16 %v115
    %v447 = vunpack.c.h.b16 %v115
    %v448 = vunpack.c.l.b16 %v116
    %v449 = vunpack.c.h.b16 %v116
    %v450 = vunpack.c.l.b16 %v117
    %v451 = vunpack.c.h.b16 %v117
    %v452 = vunpack.c.l.b16 %v118
    %v453 = vunpack.c.h.b16 %v118
    %v454 = vunpack.c.l.b16 %v119
    %v455 = vunpack.c.h.b16 %v119
    %v456 = vunpack.c.l.b16 %v120
    %v457 = vunpack.c.h.b16 %v120
    %v458 = vunpack.c.l.b16 %v121
    %v459 = vunpack.c.h.b16 %v121
    %v460 = vunpack.c.l.b16 %v122
    %v461 = vunpack.c.h.b16 %v122
    %v462 = vunpack.c.l.b16 %v123
    %v463 = vunpack.c.h.b16 %v123
    %v464 = vunpack.c.l.b16 %v124
    %v465 = vunpack.c.h.b16 %v124
    %v466 = vunpack.c.l.b16 %v125
    %v467 = vunpack.c.h.b16 %v125
    %v468 = vunpack.c.l.b16 %v126
    %v469 = vunpack.c.h.b16 %v126
    %v470 = vunpack.c.l.b16 %v127
    %v471 = vunpack.c.h.b16 %v127
    %v472 = vunpack.c.l.b16 %v128
    %v473 = vunpack.c.h.b16 %v128
    %v474 = vunpack.c.l.b16 %v129
    %v475 = vunpack.c.h.b16 %v129
    %v476 = vunpack.c.l.b16 %v130
    %v477 = vunpack.c.h.b16 %v130
    %v478 = vunpack.c.l.b16 %v131
    %v479 = vunpack.c.h.b16 %v131
    %v480 = vunpack.c.l.b16 %v132
    %v481 = vunpack.c.h.b16 %v132
    %v482 = vunpack.c.l.b16 %v133
    %v483 = vunpack.c.h.b16 %v133
    %v484 = vunpack.c.l.b16 %v134
    %v485 = vunpack.c.h.b16 %v134
    %v486 = vunpack.c.l.b16 %v135
    %v487 = vunpack.c.h.b16 %v135
    %v488 = vunpack.c.l.b16 %v136
    %v489 = vunpack.c.h.b16 %v136
    %v490 = vunpack.c.l.b16 %v137
    %v491 = vunpack.c.h.b16 %v137
    %v492 = vunpack.c.l.b16 %v138
    %v493 = vunpack.c.h.b16 %v138
    %v494 = vunpack.c.l.b16 %v139
    %v495 = vunpack.c.h.b16 %v139
    %v496 = vunpack.c.l.b16 %v140
    %v497 = vunpack.c.h.b16 %v140
    %v498 = vunpack.c.l.b16 %v141
    %v499 = vunpack.c.h.b16 %v141
    %v500 = vunpack.c.l.b16 %v142
    %v501 = vunpack.c.h.b16 %v142
    %v502 = vunpack.c.l.b16 %v143
    %v503 = vunpack.c.h.b16 %v143
    %v504 = vunpack.c.l.b16 %v144
    %v505 = vunpack.c.h.b16 %v144
    %v506 = vunpack.c.l.b16 %v145
    %v507 = vunpack.c.h.b16 %v145
    %v508 = vunpack.c.l.b16 %v146
    %v509 = vunpack.c.h.b16 %v146
    %v510 = vunpack.c.l.b16 %v147
    %v511 = vunpack.c.h.b16 %v147
    %v512 = vunpack.c.l.b16 %v148
    %v513 = vunpack.c.h.b16 %v148
    %v514 = vunpack.c.l.b16 %v149
    %v515 = vunpack.c.h.b16 %v149
    %v516 = vunpack.c.l.b16 %v150
    %v517 = vunpack.c.h.b16 %v150
    %v518 = vunpack.c.l.b16 %v151
    %v519 = vunpack.c.h.b16 %v151
    %v520 = vunpack.c.l.b16 %v152
    %v521 = vunpack.c.h.b16 %v152
    %v522 = vunpack.c.l.b16 %v153
    %v523 = vunpack.c.h.b16 %v153
    %v524 = vunpack.c.l.b16 %v154
    %v525 = vunpack.c.h.b16 %v154
    %v526 = vunpack.c.l.b16 %v155
    %v527 = vunpack.c.h.b16 %v155
    %v528 = vunpack.c.l.b16 %v156
    %v529 = vunpack.c.h.b16 %v156
    %v530 = vunpack.c.l.b16 %v157
    %v531 = vunpack.c.h.b16 %v157
    %v532 = vunpack.c.l.b16 %v158
    %v533 = vunpack.c.h.b16 %v158
    %v534 = vunpack.c.l.b16 %v159
    %v535 = vunpack.c.h.b16 %v159
    %v536 = vunpack.c.l.b16 %v160
    %v537 = vunpack.c.h.b16 %v160
    %v538 = vunpack.c.l.b16 %v161
    %v539 = vunpack.c.h.b16 %v161
    %v540 = vunpack.c.l.b16 %v162
    %v541 = vunpack.c.h.b16 %v162
    %v542 = vunpack.c.l.b16 %v163
    %v543 = vunpack.c.h.b16 %v163
    %v544 = vunpack.c.l.b16 %v164
    %v545 = vunpack.c.h.b16 %v164
    %v546 = vunpack.c.l.b16 %v165
    %v547 = vunpack.c.h.b16 %v165
    %v548 = vunpack.c.l.b16 %v166
    %v549 = vunpack.c.h.b16 %v166
    %v550 = vunpack.c.l.b16 %v167
    %v551 = vunpack.c.h.b16 %v167
    %v552 = vunpack.c.l.b16 %v168
    %v553 = vunpack.c.h.b16 %v168
    %v554 = vunpack.c.l.b16 %v169
    %v555 = vunpack.c.h.b16 %v169
    %v556 = vunpack.c.l.b16 %v170
    %v557 = vunpack.c.h.b16 %v170
    %v558 = vunpack.c.l.b16 %v171
    %v559 = vunpack.c.h.b16 %v171
    %v560 = vunpack.c.l.b16 %v172
    %v561 = vunpack.c.h.b16 %v172
    %v562 = vunpack.c.l.b16 %v173
    %v563 = vunpack.c.h.b16 %v173
    %v564 = vunpack.c.l.b16 %v174
    %v565 = vunpack.c.h.b16 %v174
    %v566 = vunpack.c.l.b16 %v175
    %v567 = vunpack.c.h.b16 %v175
    %v568 = vunpack.c.l.b16 %v176
    %v569 = vunpack.c.h.b16 %v176
    %v570 = vunpack.c.l.b16 %v177
    %v571 = vunpack.c.h.b16 %v177
    %v572 = vunpack.c.l.b16 %v178
    %v573 = vunpack.c.h.b16 %v178
    %v574 = vunpack.c.l.b16 %v179
    %v575 = vunpack.c.h.b16 %v179
    %v576 = vunpack.c.l.b16 %v180
    %v577 = vunpack.c.h.b16 %v180
    %v578 = vunpack.c.l.b16 %v181
    %v579 = vunpack.c.h.b16 %v181
    %v580 = vunpack.c.l.b16 %v182
    %v581 = vunpack.c.h.b16 %v182
    %v582 = vunpack.c.l.b16 %v183
    %v583 = vunpack.c.h.b16 %v183
    %v584 = vunpack.c.l.b16 %v184
    %v585 = vunpack.c.h.b16 %v184
    %v586 = vunpack.c.l.b16 %v185
    %v587 = vunpack.c.h.b16 %v185
    %v588 = vunpack.c.l.b16 %v186
    %v589 = vunpack.c.h.b16 %v186
    %v590 = vunpack.c.l.b16 %v187
    %v591 = vunpack.c.h.b16 %v187
    %v592 = vunpack.c.l.b16 %v188
    %v593 = vunpack.c.h.b16 %v188
    %v594 = vunpack.c.l.b16 %v189
    %v595 = vunpack.c.h.b16 %v189
    %v596 = vunpack.c.l.b16 %v190
    %v597 = vunpack.c.h.b16 %v190
    %v598 = vunpack.c.l.b16 %v191
    %v599 = vunpack.c.h.b16 %v191
    %v600 = vunpack.c.l.b16 %v192
    %v601 = vunpack.c.h.b16 %v192
    %v602 = vunpack.c.l.b16 %v193
    %v603 = vunpack.c.h.b16 %v193
    %v604 = vunpack.c.l.b16 %v194
    %v605 = vunpack.c.h.b16 %v194
    %v606 = vunpack.c.l.b16 %v195
    %v607 = vunpack.c.h.b16 %v195
    %v608 = vunpack.c.l.b16 %v196
    %v609 = vunpack.c.h.b16 %v196
    %v610 = vunpack.c.l.b16 %v197
    %v611 = vunpack.c.h.b16 %v197
    %v612 = vunpack.c.l.b16 %v198
    %v613 = vunpack.c.h.b16 %v198
    %v614 = vunpack.c.l.b16 %v199
    %v615 = vunpack.c.h.b16 %v199
    %v616 = vunpack.c.l.b16 %v200
    %v617 = vunpack.c.h.b16 %v200
    %v618 = vunpack.c.l.b16 %v201
    %v619 = vunpack.c.h.b16 %v201
    %v620 = vunpack.c.l.b16 %v202
    %v621 = vunpack.c.h.b16 %v202
    %v622 = vunpack.c.l.b16 %v203
    %v623 = vunpack.c.h.b16 %v203
    %v624 = vunpack.c.l.b16 %v204
    %v625 = vunpack.c.h.b16 %v204
    %v626 = vunpack.c.l.b16 %v205
    %v627 = vunpack.c.h.b16 %v205
    %v628 = vunpack.c.l.b16 %v206
    %v629 = vunpack.c.h.b16 %v206
    %v630 = vunpack.c.l.b16 %v207
    %v631 = vunpack.c.h.b16 %v207
    %v632 = vunpack.c.l.b16 %v208
    %v633 = vunpack.c.h.b16 %v208
    %v634 = vunpack.c.l.b16 %v209
    %v635 = vunpack.c.h.b16 %v209
    %v636 = vunpack.c.l.b16 %v210
    %v637 = vunpack.c.h.b16 %v210
    %v638 = vunpack.c.l.b16 %v211
    %v639 = vunpack.c.h.b16 %v211
    %v640 = vunpack.c.l.b16 %v212
    %v641 = vunpack.c.h.b16 %v212
    %v642 = vunpack.c.l.b16 %v213
    %v643 = vunpack.c.h.b16 %v213
    %v644 = vunpack.c.l.b16 %v214
    %v645 = vunpack.c.h.b16 %v214
    %v646 = vunpack.c.l.b16 %v215
    %v647 = vunpack.c.h.b16 %v215
    %v648 = vunpack.c.l.b16 %v216
    %v649 = vunpack.c.h.b16 %v216
    %v650 = vunpack.c.l.b16 %v217
    %v651 = vunpack.c.h.b16 %v217
    %v652 = vunpack.c.l.b16 %v218
    %v653 = vunpack.c.h.b16 %v218
    %v654 = vunpack.c.l.b16 %v219
    %v655 = vunpack.c.h.b16 %v219
    %v656 = vunpack.c.l.b16 %v220
    %v657 = vunpack.c.h.b16 %v220
    %v658 = vunpack.c.l.b16 %v221
    %v659 = vunpack.c.h.b16 %v221
    %v660 = vunpack.c.l.b16 %v222
    %v661 = vunpack.c.h.b16 %v222
    %v662 = vunpack.c.l.b16 %v223
    %v663 = vunpack.c.h.b16 %v223
    %v664 = vunpack.c.l.b16 %v224
    %v665 = vunpack.c.h.b16 %v224
    %v666 = vunpack.c.l.b16 %v225
    %v667 = vunpack.c.h.b16 %v225
    %v668 = vunpack.c.l.b16 %v226
    %v669 = vunpack.c.h.b16 %v226
    %v670 = vunpack.c.l.b16 %v227
    %v671 = vunpack.c.h.b16 %v227
    %v672 = vunpack.c.l.b16 %v228
    %v673 = vunpack.c.h.b16 %v228
    %v674 = vunpack.c.l.b16 %v229
    %v675 = vunpack.c.h.b16 %v229
    %v676 = vunpack.c.l.b16 %v230
    %v677 = vunpack.c.h.b16 %v230
    %v678 = vunpack.c.l.b16 %v231
    %v679 = vunpack.c.h.b16 %v231
    %v680 = vunpack.c.l.b16 %v232
    %v681 = vunpack.c.h.b16 %v232
    %v682 = vpack.c.b16 %v428, %v426
    %v683 = vpack.c.b16 %v429, %v427
    %v684 = vpack.c.b16 %v432, %v430
    %v685 = vpack.c.b16 %v433, %v431
    %v686 = vpack.c.b16 %v436, %v434
    %v687 = vpack.c.b16 %v437, %v435
    %v688 = vpack.c.b16 %v440, %v438
    %v689 = vpack.c.b16 %v441, %v439
    %v690 = vpack.c.b16 %v444, %v442
    %v691 = vpack.c.b16 %v445, %v443
    %v692 = vpack.c.b16 %v448, %v446
    %v693 = vpack.c.b16 %v449, %v447
    %v694 = vpack.c.b16 %v452, %v450
    %v695 = vpack.c.b16 %v453, %v451
    %v696 = vpack.c.b16 %v456, %v454
    %v697 = vpack.c.b16 %v457, %v455
    %v698 = vpack.c.b16 %v460, %v458
    %v699 = vpack.c.b16 %v461, %v459
    %v700 = vpack.c.b16 %v464, %v462
    %v701 = vpack.c.b16 %v465, %v463
    %v702 = vpack.c.b16 %v468, %v466
    %v703 = vpack.c.b16 %v469, %v467
    %v704 = vpack.c.b16 %v472, %v470
    %v705 = vpack.c.b16 %v473, %v471
    %v706 = vpack.c.b16 %v476, %v474
    %v707 = vpack.c.b16 %v477, %v475
    %v708 = vpack.c.b16 %v480, %v478
    %v709 = vpack.c.b16 %v481, %v479
    %v710 = vpack.c.b16 %v484, %v482
    %v711 = vpack.c.b16 %v485, %v483
    %v712 = vpack.c.b16 %v488, %v486
    %v713 = vpack.c.b16 %v489, %v487
    %v714 = vpack.c.b16 %v492, %v490
    %v715 = vpack.c.b16 %v493, %v491
    %v716 = vpack.c.b16 %v496, %v494
    %v717 = vpack.c.b16 %v497, %v495
    %v718 = vpack.c.b16 %v500, %v498
    %v719 = vpack.c.b16 %v501, %v499
    %v720 = vpack.c.b16 %v504, %v502
    %v721 = vpack.c.b16 %v505, %v503
    %v722 = vpack.c.b16 %v508, %v506
    %v723 = vpack.c.b16 %v509, %v507
    %v724 = vpack.c.b16 %v512, %v510
    %v725 = vpack.c.b16 %v513, %v511
    %v726 = vpack.c.b16 %v516, %v514
    %v727 = vpack.c.b16 %v517, %v515
    %v728 = vpack.c.b16 %v520, %v518
    %v729 = vpack.c.b16 %v521, %v519
    %v730 = vpack.c.b16 %v524, %v522
    %v731 = vpack.c.b16 %v525, %v523
    %v732 = vpack.c.b16 %v528, %v526
    %v733 = vpack.c.b16 %v529, %v527
    %v734 = vpack.c.b16 %v532, %v530
    %v735 = vpack.c.b16 %v533, %v531
    %v736 = vpack.c.b16 %v536, %v534
    %v737 = vpack.c.b16 %v537, %v535
    %v738 = vpack.c.b16 %v540, %v538
    %v739 = vpack.c.b16 %v541, %v539
    %v740 = vpack.c.b16 %v544, %v542
    %v741 = vpack.c.b16 %v545, %v543
    %v742 = vpack.c.b16 %v548, %v546
    %v743 = vpack.c.b16 %v549, %v547
    %v744 = vpack.c.b16 %v552, %v550
    %v745 = vpack.c.b16 %v553, %v551
    %v746 = vpack.c.b16 %v556, %v554
    %v747 = vpack.c.b16 %v557, %v555
    %v748 = vpack.c.b16 %v560, %v558
    %v749 = vpack.c.b16 %v561, %v559
    %v750 = vpack.c.b16 %v564, %v562
    %v751 = vpack.c.b16 %v565, %v563
    %v752 = vpack.c.b16 %v568, %v566
    %v753 = vpack.c.b16 %v569, %v567
    %v754 = vpack.c.b16 %v572, %v570
    %v755 = vpack.c.b16 %v573, %v571
    %v756 = vpack.c.b16 %v576, %v574
    %v757 = vpack.c.b16 %v577, %v575
    %v758 = vpack.c.b16 %v580, %v578
    %v759 = vpack.c.b16 %v581, %v579
    %v760 = vpack.c.b16 %v584, %v582
    %v761 = vpack.c.b16 %v585, %v583
    %v762 = vpack.c.b16 %v588, %v586
    %v763 = vpack.c.b16 %v589, %v587
    %v764 = vpack.c.b16 %v592, %v590
    %v765 = vpack.c.b16 %v593, %v591
    %v766 = vpack.c.b16 %v596, %v594
    %v767 = vpack.c.b16 %v597, %v595
    %v768 = vpack.c.b16 %v600, %v598
    %v769 = vpack.c.b16 %v601, %v599
    %v770 = vpack.c.b16 %v604, %v602
    %v771 = vpack.c.b16 %v605, %v603
    %v772 = vpack.c.b16 %v608, %v606
    %v773 = vpack.c.b16 %v609, %v607
    %v774 = vpack.c.b16 %v612, %v610
    %v775 = vpack.c.b16 %v613, %v611
    %v776 = vpack.c.b16 %v616, %v614
    %v777 = vpack.c.b16 %v617, %v615
    %v778 = vpack.c.b16 %v620, %v618
    %v779 = vpack.c.b16 %v621, %v619
    %v780 = vpack.c.b16 %v624, %v622
    %v781 = vpack.c.b16 %v625, %v623
    %v782 = vpack.c.b16 %v628, %v626
    %v783 = vpack.c.b16 %v629, %v627
    %v784 = vpack.c.b16 %v632, %v630
    %v785 = vpack.c.b16 %v633, %v631
    %v786 = vpack.c.b16 %v636, %v634
    %v787 = vpack.c.b16 %v637, %v635
    %v788 = vpack.c.b16 %v640, %v638
    %v789 = vpack.c.b16 %v641, %v639
    %v790 = vpack.c.b16 %v644, %v642
    %v791 = vpack.c.b16 %v645, %v643
    %v792 = vpack.c.b16 %v648, %v646
    %v793 = vpack.c.b16 %v649, %v647
    %v794 = vpack.c.b16 %v652, %v650
    %v795 = vpack.c.b16 %v653, %v651
    %v796 = vpack.c.b16 %v656, %v654
    %v797 = vpack.c.b16 %v657, %v655
    %v798 = vpack.c.b16 %v660, %v658
    %v799 = vpack.c.b16 %v661, %v659
    %v800 = vpack.c.b16 %v664, %v662
    %v801 = vpack.c.b16 %v665, %v663
    %v802 = vpack.c.b16 %v668, %v666
    %v803 = vpack.c.b16 %v669, %v667
    %v804 = vpack.c.b16 %v672, %v670
    %v805 = vpack.c.b16 %v673, %v671
    %v806 = vpack.c.b16 %v676, %v674
    %v807 = vpack.c.b16 %v677, %v675
    %v808 = vpack.c.b16 %v680, %v678
    %v809 = vpack.c.b16 %v681, %v679
    %938 = vmatprep.subr.bf16.mxu0 %v697
    %939 = vmatpush1.bf16.msra.mxu0 %v696
    %940 = vmatprep.subr.bf16.mxu0 %v695
    %941 = vmatpush1.bf16.msra.mxu0 %v694
    %942 = vmatprep.subr.bf16.mxu0 %v693
    %943 = vmatpush1.bf16.msra.mxu0 %v692
    %944 = vmatprep.subr.bf16.mxu0 %v691
    %945 = vmatpush1.bf16.msra.mxu0 %v690
    %946 = vmatprep.subr.bf16.mxu0 %v689
    %947 = vmatpush1.bf16.msra.mxu0 %v688
    %948 = vmatprep.subr.bf16.mxu0 %v687
    %949 = vmatpush1.bf16.msra.mxu0 %v686
    %950 = vmatprep.subr.bf16.mxu0 %v685
    %951 = vmatpush1.bf16.msra.mxu0 %v684
    %952 = vmatprep.subr.bf16.mxu0 %v683
    %953 = vmatpush1.bf16.msra.mxu0 %v682
    %954 = vmatprep.subr.bf16.mxu0 %v713
    %955 = vmatpush2.bf16.msra.mxu0 %v712
    %956 = vmatprep.subr.bf16.mxu0 %v711
    %957 = vmatpush2.bf16.msra.mxu0 %v710
    %958 = vmatprep.subr.bf16.mxu0 %v709
    %959 = vmatpush2.bf16.msra.mxu0 %v708
    %960 = vmatprep.subr.bf16.mxu0 %v707
    %961 = vmatpush2.bf16.msra.mxu0 %v706
    %962 = vmatprep.subr.bf16.mxu0 %v705
    %963 = vmatpush2.bf16.msra.mxu0 %v704
    %964 = vmatprep.subr.bf16.mxu0 %v703
    %965 = vmatpush2.bf16.msra.mxu0 %v702
    %966 = vmatprep.subr.bf16.mxu0 %v701
    %967 = vmatpush2.bf16.msra.mxu0 %v700
    %968 = vmatprep.subr.bf16.mxu0 %v699
    %969 = vmatpush2.bf16.msra.mxu0 %v698
    %970 = vmatprep.mubr.bf16.mxu0 %v280
    %971 = vmatmul.mubr.bf16.gmra.mxu0 %v279
    %v972 = vpop.f32.mrf.mxu0
    %v973 = vadd.f32 %v291, %v972
    %v974 = vpop.f32.mrf.mxu0
    %v975 = vadd.f32 %v295, %v974
    %v976 = vpop.f32.mrf.mxu0
    %v977 = vpop.f32.mrf.mxu0
    %978 = vdwg.mxu0
    %979 = vmatprep.subr.bf16.mxu0 %v729
    %980 = vmatpush1.bf16.msra.mxu0 %v728
    %981 = vmatprep.subr.bf16.mxu0 %v727
    %982 = vmatpush1.bf16.msra.mxu0 %v726
    %983 = vmatprep.subr.bf16.mxu0 %v725
    %984 = vmatpush1.bf16.msra.mxu0 %v724
    %985 = vmatprep.subr.bf16.mxu0 %v723
    %986 = vmatpush1.bf16.msra.mxu0 %v722
    %987 = vmatprep.subr.bf16.mxu0 %v721
    %988 = vmatpush1.bf16.msra.mxu0 %v720
    %989 = vmatprep.subr.bf16.mxu0 %v719
    %990 = vmatpush1.bf16.msra.mxu0 %v718
    %991 = vmatprep.subr.bf16.mxu0 %v717
    %992 = vmatpush1.bf16.msra.mxu0 %v716
    %993 = vmatprep.subr.bf16.mxu0 %v715
    %994 = vmatpush1.bf16.msra.mxu0 %v714
    %995 = vmatprep.subr.bf16.mxu0 %v745
    %996 = vmatpush2.bf16.msra.mxu0 %v744
    %997 = vmatprep.subr.bf16.mxu0 %v743
    %998 = vmatpush2.bf16.msra.mxu0 %v742
    %999 = vmatprep.subr.bf16.mxu0 %v741
    %1000 = vmatpush2.bf16.msra.mxu0 %v740
    %1001 = vmatprep.subr.bf16.mxu0 %v739
    %1002 = vmatpush2.bf16.msra.mxu0 %v738
    %1003 = vmatprep.subr.bf16.mxu0 %v737
    %1004 = vmatpush2.bf16.msra.mxu0 %v736
    %1005 = vmatprep.subr.bf16.mxu0 %v735
    %1006 = vmatpush2.bf16.msra.mxu0 %v734
    %1007 = vmatprep.subr.bf16.mxu0 %v733
    %1008 = vmatpush2.bf16.msra.mxu0 %v732
    %1009 = vmatprep.subr.bf16.mxu0 %v731
    %1010 = vmatpush2.bf16.msra.mxu0 %v730
    %1011 = vmatprep.mubr.bf16.mxu0 %v282
    %1012 = vmatmul.mubr.bf16.gmra.mxu0 %v281
    %v1013 = vpop.f32.mrf.mxu0
    %v1014 = vadd.f32 %v973, %v1013
    %v1015 = vpop.f32.mrf.mxu0
    %v1016 = vadd.f32 %v975, %v1015
    %v1017 = vpop.f32.mrf.mxu0
    %v1018 = vpop.f32.mrf.mxu0
    %1019 = vdwg.mxu0
    %1020 = vmatprep.subr.bf16.mxu0 %v761
    %1021 = vmatpush1.bf16.msra.mxu0 %v760
    %1022 = vmatprep.subr.bf16.mxu0 %v759
    %1023 = vmatpush1.bf16.msra.mxu0 %v758
    %1024 = vmatprep.subr.bf16.mxu0 %v757
    %1025 = vmatpush1.bf16.msra.mxu0 %v756
    %1026 = vmatprep.subr.bf16.mxu0 %v755
    %1027 = vmatpush1.bf16.msra.mxu0 %v754
    %1028 = vmatprep.subr.bf16.mxu0 %v753
    %1029 = vmatpush1.bf16.msra.mxu0 %v752
    %1030 = vmatprep.subr.bf16.mxu0 %v751
    %1031 = vmatpush1.bf16.msra.mxu0 %v750
    %1032 = vmatprep.subr.bf16.mxu0 %v749
    %1033 = vmatpush1.bf16.msra.mxu0 %v748
    %1034 = vmatprep.subr.bf16.mxu0 %v747
    %1035 = vmatpush1.bf16.msra.mxu0 %v746
    %1036 = vmatprep.subr.bf16.mxu0 %v777
    %1037 = vmatpush2.bf16.msra.mxu0 %v776
    %1038 = vmatprep.subr.bf16.mxu0 %v775
    %1039 = vmatpush2.bf16.msra.mxu0 %v774
    %1040 = vmatprep.subr.bf16.mxu0 %v773
    %1041 = vmatpush2.bf16.msra.mxu0 %v772
    %1042 = vmatprep.subr.bf16.mxu0 %v771
    %1043 = vmatpush2.bf16.msra.mxu0 %v770
    %1044 = vmatprep.subr.bf16.mxu0 %v769
    %1045 = vmatpush2.bf16.msra.mxu0 %v768
    %1046 = vmatprep.subr.bf16.mxu0 %v767
    %1047 = vmatpush2.bf16.msra.mxu0 %v766
    %1048 = vmatprep.subr.bf16.mxu0 %v765
    %1049 = vmatpush2.bf16.msra.mxu0 %v764
    %1050 = vmatprep.subr.bf16.mxu0 %v763
    %1051 = vmatpush2.bf16.msra.mxu0 %v762
    %1052 = vmatprep.mubr.bf16.mxu0 %v284
    %1053 = vmatmul.mubr.bf16.gmra.mxu0 %v283
    %v1054 = vpop.f32.mrf.mxu0
    %v1055 = vadd.f32 %v1014, %v1054
    %v1056 = vpop.f32.mrf.mxu0
    %v1057 = vadd.f32 %v1016, %v1056
    %v1058 = vpop.f32.mrf.mxu0
    %v1059 = vpop.f32.mrf.mxu0
    %1060 = vdwg.mxu0
    %1061 = vmatprep.subr.bf16.mxu0 %v793
    %1062 = vmatpush1.bf16.msra.mxu0 %v792
    %1063 = vmatprep.subr.bf16.mxu0 %v791
    %1064 = vmatpush1.bf16.msra.mxu0 %v790
    %1065 = vmatprep.subr.bf16.mxu0 %v789
    %1066 = vmatpush1.bf16.msra.mxu0 %v788
    %1067 = vmatprep.subr.bf16.mxu0 %v787
    %1068 = vmatpush1.bf16.msra.mxu0 %v786
    %1069 = vmatprep.subr.bf16.mxu0 %v785
    %1070 = vmatpush1.bf16.msra.mxu0 %v784
    %1071 = vmatprep.subr.bf16.mxu0 %v783
    %1072 = vmatpush1.bf16.msra.mxu0 %v782
    %1073 = vmatprep.subr.bf16.mxu0 %v781
    %1074 = vmatpush1.bf16.msra.mxu0 %v780
    %1075 = vmatprep.subr.bf16.mxu0 %v779
    %1076 = vmatpush1.bf16.msra.mxu0 %v778
    %1077 = vmatprep.subr.bf16.mxu0 %v809
    %1078 = vmatpush2.bf16.msra.mxu0 %v808
    %1079 = vmatprep.subr.bf16.mxu0 %v807
    %1080 = vmatpush2.bf16.msra.mxu0 %v806
    %1081 = vmatprep.subr.bf16.mxu0 %v805
    %1082 = vmatpush2.bf16.msra.mxu0 %v804
    %1083 = vmatprep.subr.bf16.mxu0 %v803
    %1084 = vmatpush2.bf16.msra.mxu0 %v802
    %1085 = vmatprep.subr.bf16.mxu0 %v801
    %1086 = vmatpush2.bf16.msra.mxu0 %v800
    %1087 = vmatprep.subr.bf16.mxu0 %v799
    %1088 = vmatpush2.bf16.msra.mxu0 %v798
    %1089 = vmatprep.subr.bf16.mxu0 %v797
    %1090 = vmatpush2.bf16.msra.mxu0 %v796
    %1091 = vmatprep.subr.bf16.mxu0 %v795
    %1092 = vmatpush2.bf16.msra.mxu0 %v794
    %1093 = vmatprep.mubr.bf16.mxu0 %v286
    %1094 = vmatmul.mubr.bf16.gmra.mxu0 %v285
    %v1095 = vpop.f32.mrf.mxu0
    %v1096 = vadd.f32 %v1055, %v1095
    %v1097 = vpop.f32.mrf.mxu0
    %v1098 = vadd.f32 %v1057, %v1097
    %v1099 = vpop.f32.mrf.mxu0
    %v1100 = vpop.f32.mrf.mxu0
    %1101 = vdwg.mxu0
    %vm1102 = vcmask 1041408
    %v1103 = vsel %vm1102, %v1096, -inf
    %1104 = vmax.xlane.f32.xlu0 %v1103
    %v1105 = vpop.xlane.xlu0 %1104
    %v1106 = vsub.f32 %v1096, %v1105
    %v1107 = vmul.f32 %v1106, 1.442695
    %v1108 = vpow.pop %v1107
    %v1109 = vsel %vm1102, %v1108, 0.0
    %1110 = vadd.xlane.f32.xlu0 %v1109
    %v1111 = vpop.xlane.xlu0 %1110
    %v1112 = vlog2.pop %v1111
    %v1113 = vmul.f32 %v1112, 0.6931472
    %v1114 = vsub.f32 %v1106, %v1113
    %v1115 = vmul.f32 %v234, %v1114
    %v1116 = vsel %vm1102, %v1115, 0.0
    %v1117 = vrot.slane %v1116, 4
    %v1118 = vadd.f32 %v1116, %v1117
    %v1119 = vrot.slane %v1118, 2
    %v1120 = vadd.f32 %v1118, %v1119
    %v1121 = vrot.slane %v1120, 1
    %v1122 = vadd.f32 %v1120, %v1121
    %v1123 = vsub.f32 0.0, %v1122
    %v1124 = vmul.f32 %v1114, 1.442695
    %v1125 = vpow.pop %v1124
    %v1126 = vsel %vm1102, %v1098, -inf
    %1127 = vmax.xlane.f32.xlu0 %v1126
    %v1128 = vpop.xlane.xlu0 %1127
    %v1129 = vsub.f32 %v1098, %v1128
    %v1130 = vmul.f32 %v1129, 1.442695
    %v1131 = vpow.pop %v1130
    %v1132 = vsel %vm1102, %v1131, 0.0
    %1133 = vadd.xlane.f32.xlu0 %v1132
    %v1134 = vpop.xlane.xlu0 %1133
    %v1135 = vlog2.pop %v1134
    %v1136 = vmul.f32 %v1135, 0.6931472
    %v1137 = vsub.f32 %v1129, %v1136
    %v1138 = vmul.f32 %v234, %v1137
    %v1139 = vsel %vm1102, %v1138, 0.0
    %v1140 = vrot.slane %v1139, 4
    %v1141 = vadd.f32 %v1139, %v1140
    %v1142 = vrot.slane %v1141, 2
    %v1143 = vadd.f32 %v1141, %v1142
    %v1144 = vrot.slane %v1143, 1
    %v1145 = vadd.f32 %v1143, %v1144
    %v1146 = vsub.f32 0.0, %v1145
    %v1147 = vmul.f32 %v1137, 1.442695
    %v1148 = vpow.pop %v1147
    %v1149 = vsub.f32 %v1146, %v1123
    %v1150 = vmul.f32 %v1149, 0.5
    %vm1151 = vcmp.ge.f32.partialorder %v94, 0.0
    %vm1152 = vcmp.ge.f32.partialorder %v95, 0.0
    %vm1153 = vcmp.le.f32.partialorder %v94, 1.0
    %vm1154 = vcmp.le.f32.partialorder %v95, 1.0
    %vm1155 = vmand %vm1151, %vm1153
    %vm1156 = vmand %vm1152, %vm1154
    %v1157 = vsel %vm1155, %v87, 0.0
    %v1158 = vsel %vm1156, %v88, 0.0
    %v1161 = vcombine.high %v1157, %v1157
    %v1163 = vunpack.c.l.s4 1983009808
    %v1164 = vunpack.c.0.s8 %v1163
    %v1165 = vlaneseq
    %v1166 = vshrl.u32 %v1165, 7
    %v1167 = vsub.s32 %v1164, %v1166
    %v1168 = vrot.slane %v1157, %v1167
    %v1170 = vunpack.c.l.s4 1983009808
    %v1171 = vunpack.c.0.s8 %v1170
    %v1172 = vlaneseq
    %v1173 = vshrl.u32 %v1172, 7
    %v1174 = vsub.s32 %v1171, %v1173
    %v1175 = vrot.slane %v1161, %v1174
    %v1176 = vcombine.high %v1168, %v1168
    %v1177 = vcombine.high %v1175, %v1175
    %v1178 = vcombine.high %v1158, %v1158
    %v1180 = vunpack.c.l.s4 1983009808
    %v1181 = vunpack.c.0.s8 %v1180
    %v1182 = vlaneseq
    %v1183 = vshrl.u32 %v1182, 7
    %v1184 = vsub.s32 %v1181, %v1183
    %v1185 = vrot.slane %v1158, %v1184
    %v1187 = vunpack.c.l.s4 1983009808
    %v1188 = vunpack.c.0.s8 %v1187
    %v1189 = vlaneseq
    %v1190 = vshrl.u32 %v1189, 7
    %v1191 = vsub.s32 %v1188, %v1190
    %v1192 = vrot.slane %v1178, %v1191
    %v1193 = vcombine.high %v1185, %v1185
    %v1194 = vcombine.high %v1192, %v1192
    %v1203 = vpack.c.bf16 %v1168, %v1168
    %v1204 = vpack.c.bf16 %v1176, %v1176
    %v1205 = vpack.c.bf16 %v1175, %v1175
    %v1206 = vpack.c.bf16 %v1177, %v1177
    %v1207 = vpack.c.bf16 %v1185, %v1185
    %v1208 = vpack.c.bf16 %v1193, %v1193
    %v1209 = vpack.c.bf16 %v1192, %v1192
    %v1210 = vpack.c.bf16 %v1194, %v1194
    %v1211 = vsel %vm1155, 1.0, 0.0
    %v1212 = vsel %vm1156, 1.0, 0.0
    %v1215 = vcombine.high %v1211, %v1211
    %v1217 = vunpack.c.l.s4 1983009808
    %v1218 = vunpack.c.0.s8 %v1217
    %v1219 = vlaneseq
    %v1220 = vshrl.u32 %v1219, 7
    %v1221 = vsub.s32 %v1218, %v1220
    %v1222 = vrot.slane %v1211, %v1221
    %v1224 = vunpack.c.l.s4 1983009808
    %v1225 = vunpack.c.0.s8 %v1224
    %v1226 = vlaneseq
    %v1227 = vshrl.u32 %v1226, 7
    %v1228 = vsub.s32 %v1225, %v1227
    %v1229 = vrot.slane %v1215, %v1228
    %v1230 = vcombine.high %v1222, %v1222
    %v1231 = vcombine.high %v1229, %v1229
    %v1232 = vcombine.high %v1212, %v1212
    %v1234 = vunpack.c.l.s4 1983009808
    %v1235 = vunpack.c.0.s8 %v1234
    %v1236 = vlaneseq
    %v1237 = vshrl.u32 %v1236, 7
    %v1238 = vsub.s32 %v1235, %v1237
    %v1239 = vrot.slane %v1212, %v1238
    %v1241 = vunpack.c.l.s4 1983009808
    %v1242 = vunpack.c.0.s8 %v1241
    %v1243 = vlaneseq
    %v1244 = vshrl.u32 %v1243, 7
    %v1245 = vsub.s32 %v1242, %v1244
    %v1246 = vrot.slane %v1232, %v1245
    %v1247 = vcombine.high %v1239, %v1239
    %v1248 = vcombine.high %v1246, %v1246
    %v1257 = vpack.c.bf16 %v1222, %v1222
    %v1258 = vpack.c.bf16 %v1230, %v1230
    %v1259 = vpack.c.bf16 %v1229, %v1229
    %v1260 = vpack.c.bf16 %v1231, %v1231
    %v1261 = vpack.c.bf16 %v1239, %v1239
    %v1262 = vpack.c.bf16 %v1247, %v1247
    %v1263 = vpack.c.bf16 %v1246, %v1246
    %v1264 = vpack.c.bf16 %v1248, %v1248
    %1265 = vmatprep.subr.bf16.mxu0 %v697
    %1266 = vmatpush1.bf16.msra.mxu0 %v696
    %1267 = vmatprep.subr.bf16.mxu0 %v695
    %1268 = vmatpush1.bf16.msra.mxu0 %v694
    %1269 = vmatprep.subr.bf16.mxu0 %v693
    %1270 = vmatpush1.bf16.msra.mxu0 %v692
    %1271 = vmatprep.subr.bf16.mxu0 %v691
    %1272 = vmatpush1.bf16.msra.mxu0 %v690
    %1273 = vmatprep.subr.bf16.mxu0 %v689
    %1274 = vmatpush1.bf16.msra.mxu0 %v688
    %1275 = vmatprep.subr.bf16.mxu0 %v687
    %1276 = vmatpush1.bf16.msra.mxu0 %v686
    %1277 = vmatprep.subr.bf16.mxu0 %v685
    %1278 = vmatpush1.bf16.msra.mxu0 %v684
    %1279 = vmatprep.subr.bf16.mxu0 %v683
    %1280 = vmatpush1.bf16.msra.mxu0 %v682
    %1281 = vmatprep.subr.bf16.mxu0 %v713
    %1282 = vmatpush2.bf16.msra.mxu0 %v712
    %1283 = vmatprep.subr.bf16.mxu0 %v711
    %1284 = vmatpush2.bf16.msra.mxu0 %v710
    %1285 = vmatprep.subr.bf16.mxu0 %v709
    %1286 = vmatpush2.bf16.msra.mxu0 %v708
    %1287 = vmatprep.subr.bf16.mxu0 %v707
    %1288 = vmatpush2.bf16.msra.mxu0 %v706
    %1289 = vmatprep.subr.bf16.mxu0 %v705
    %1290 = vmatpush2.bf16.msra.mxu0 %v704
    %1291 = vmatprep.subr.bf16.mxu0 %v703
    %1292 = vmatpush2.bf16.msra.mxu0 %v702
    %1293 = vmatprep.subr.bf16.mxu0 %v701
    %1294 = vmatpush2.bf16.msra.mxu0 %v700
    %1295 = vmatprep.subr.bf16.mxu0 %v699
    %1296 = vmatpush2.bf16.msra.mxu0 %v698
    %1297 = vmatprep.mubr.bf16.mxu0 %v1204
    %1298 = vmatmul.mubr.bf16.gmra.mxu0 %v1203
    %v1299 = vpop.f32.mrf.mxu0
    %v1300 = vadd.f32 0.0, %v1299
    %v1301 = vpop.f32.mrf.mxu0
    %v1302 = vadd.f32 0.0, %v1301
    %v1303 = vpop.f32.mrf.mxu0
    %v1304 = vpop.f32.mrf.mxu0
    %1305 = vdwg.mxu0
    %1306 = vmatprep.subr.bf16.mxu0 %v729
    %1307 = vmatpush1.bf16.msra.mxu0 %v728
    %1308 = vmatprep.subr.bf16.mxu0 %v727
    %1309 = vmatpush1.bf16.msra.mxu0 %v726
    %1310 = vmatprep.subr.bf16.mxu0 %v725
    %1311 = vmatpush1.bf16.msra.mxu0 %v724
    %1312 = vmatprep.subr.bf16.mxu0 %v723
    %1313 = vmatpush1.bf16.msra.mxu0 %v722
    %1314 = vmatprep.subr.bf16.mxu0 %v721
    %1315 = vmatpush1.bf16.msra.mxu0 %v720
    %1316 = vmatprep.subr.bf16.mxu0 %v719
    %1317 = vmatpush1.bf16.msra.mxu0 %v718
    %1318 = vmatprep.subr.bf16.mxu0 %v717
    %1319 = vmatpush1.bf16.msra.mxu0 %v716
    %1320 = vmatprep.subr.bf16.mxu0 %v715
    %1321 = vmatpush1.bf16.msra.mxu0 %v714
    %1322 = vmatprep.subr.bf16.mxu0 %v745
    %1323 = vmatpush2.bf16.msra.mxu0 %v744
    %1324 = vmatprep.subr.bf16.mxu0 %v743
    %1325 = vmatpush2.bf16.msra.mxu0 %v742
    %1326 = vmatprep.subr.bf16.mxu0 %v741
    %1327 = vmatpush2.bf16.msra.mxu0 %v740
    %1328 = vmatprep.subr.bf16.mxu0 %v739
    %1329 = vmatpush2.bf16.msra.mxu0 %v738
    %1330 = vmatprep.subr.bf16.mxu0 %v737
    %1331 = vmatpush2.bf16.msra.mxu0 %v736
    %1332 = vmatprep.subr.bf16.mxu0 %v735
    %1333 = vmatpush2.bf16.msra.mxu0 %v734
    %1334 = vmatprep.subr.bf16.mxu0 %v733
    %1335 = vmatpush2.bf16.msra.mxu0 %v732
    %1336 = vmatprep.subr.bf16.mxu0 %v731
    %1337 = vmatpush2.bf16.msra.mxu0 %v730
    %1338 = vmatprep.mubr.bf16.mxu0 %v1206
    %1339 = vmatmul.mubr.bf16.gmra.mxu0 %v1205
    %v1340 = vpop.f32.mrf.mxu0
    %v1341 = vadd.f32 %v1300, %v1340
    %v1342 = vpop.f32.mrf.mxu0
    %v1343 = vadd.f32 %v1302, %v1342
    %v1344 = vpop.f32.mrf.mxu0
    %v1345 = vpop.f32.mrf.mxu0
    %1346 = vdwg.mxu0
    %1347 = vmatprep.subr.bf16.mxu0 %v761
    %1348 = vmatpush1.bf16.msra.mxu0 %v760
    %1349 = vmatprep.subr.bf16.mxu0 %v759
    %1350 = vmatpush1.bf16.msra.mxu0 %v758
    %1351 = vmatprep.subr.bf16.mxu0 %v757
    %1352 = vmatpush1.bf16.msra.mxu0 %v756
    %1353 = vmatprep.subr.bf16.mxu0 %v755
    %1354 = vmatpush1.bf16.msra.mxu0 %v754
    %1355 = vmatprep.subr.bf16.mxu0 %v753
    %1356 = vmatpush1.bf16.msra.mxu0 %v752
    %1357 = vmatprep.subr.bf16.mxu0 %v751
    %1358 = vmatpush1.bf16.msra.mxu0 %v750
    %1359 = vmatprep.subr.bf16.mxu0 %v749
    %1360 = vmatpush1.bf16.msra.mxu0 %v748
    %1361 = vmatprep.subr.bf16.mxu0 %v747
    %1362 = vmatpush1.bf16.msra.mxu0 %v746
    %1363 = vmatprep.subr.bf16.mxu0 %v777
    %1364 = vmatpush2.bf16.msra.mxu0 %v776
    %1365 = vmatprep.subr.bf16.mxu0 %v775
    %1366 = vmatpush2.bf16.msra.mxu0 %v774
    %1367 = vmatprep.subr.bf16.mxu0 %v773
    %1368 = vmatpush2.bf16.msra.mxu0 %v772
    %1369 = vmatprep.subr.bf16.mxu0 %v771
    %1370 = vmatpush2.bf16.msra.mxu0 %v770
    %1371 = vmatprep.subr.bf16.mxu0 %v769
    %1372 = vmatpush2.bf16.msra.mxu0 %v768
    %1373 = vmatprep.subr.bf16.mxu0 %v767
    %1374 = vmatpush2.bf16.msra.mxu0 %v766
    %1375 = vmatprep.subr.bf16.mxu0 %v765
    %1376 = vmatpush2.bf16.msra.mxu0 %v764
    %1377 = vmatprep.subr.bf16.mxu0 %v763
    %1378 = vmatpush2.bf16.msra.mxu0 %v762
    %1379 = vmatprep.mubr.bf16.mxu0 %v1208
    %1380 = vmatmul.mubr.bf16.gmra.mxu0 %v1207
    %v1381 = vpop.f32.mrf.mxu0
    %v1382 = vadd.f32 %v1341, %v1381
    %v1383 = vpop.f32.mrf.mxu0
    %v1384 = vadd.f32 %v1343, %v1383
    %v1385 = vpop.f32.mrf.mxu0
    %v1386 = vpop.f32.mrf.mxu0
    %1387 = vdwg.mxu0
    %1388 = vmatprep.subr.bf16.mxu0 %v793
    %1389 = vmatpush1.bf16.msra.mxu0 %v792
    %1390 = vmatprep.subr.bf16.mxu0 %v791
    %1391 = vmatpush1.bf16.msra.mxu0 %v790
    %1392 = vmatprep.subr.bf16.mxu0 %v789
    %1393 = vmatpush1.bf16.msra.mxu0 %v788
    %1394 = vmatprep.subr.bf16.mxu0 %v787
    %1395 = vmatpush1.bf16.msra.mxu0 %v786
    %1396 = vmatprep.subr.bf16.mxu0 %v785
    %1397 = vmatpush1.bf16.msra.mxu0 %v784
    %1398 = vmatprep.subr.bf16.mxu0 %v783
    %1399 = vmatpush1.bf16.msra.mxu0 %v782
    %1400 = vmatprep.subr.bf16.mxu0 %v781
    %1401 = vmatpush1.bf16.msra.mxu0 %v780
    %1402 = vmatprep.subr.bf16.mxu0 %v779
    %1403 = vmatpush1.bf16.msra.mxu0 %v778
    %1404 = vmatprep.subr.bf16.mxu0 %v809
    %1405 = vmatpush2.bf16.msra.mxu0 %v808
    %1406 = vmatprep.subr.bf16.mxu0 %v807
    %1407 = vmatpush2.bf16.msra.mxu0 %v806
    %1408 = vmatprep.subr.bf16.mxu0 %v805
    %1409 = vmatpush2.bf16.msra.mxu0 %v804
    %1410 = vmatprep.subr.bf16.mxu0 %v803
    %1411 = vmatpush2.bf16.msra.mxu0 %v802
    %1412 = vmatprep.subr.bf16.mxu0 %v801
    %1413 = vmatpush2.bf16.msra.mxu0 %v800
    %1414 = vmatprep.subr.bf16.mxu0 %v799
    %1415 = vmatpush2.bf16.msra.mxu0 %v798
    %1416 = vmatprep.subr.bf16.mxu0 %v797
    %1417 = vmatpush2.bf16.msra.mxu0 %v796
    %1418 = vmatprep.subr.bf16.mxu0 %v795
    %1419 = vmatpush2.bf16.msra.mxu0 %v794
    %1420 = vmatprep.mubr.bf16.mxu0 %v1210
    %1421 = vmatmul.mubr.bf16.gmra.mxu0 %v1209
    %v1422 = vpop.f32.mrf.mxu0
    %v1423 = vadd.f32 %v1382, %v1422
    %v1424 = vpop.f32.mrf.mxu0
    %v1425 = vadd.f32 %v1384, %v1424
    %v1426 = vpop.f32.mrf.mxu0
    %v1427 = vpop.f32.mrf.mxu0
    %1428 = vdwg.mxu0
    %1429 = vmatprep.subr.bf16.mxu0 %v697
    %1430 = vmatpush1.bf16.msra.mxu0 %v696
    %1431 = vmatprep.subr.bf16.mxu0 %v695
    %1432 = vmatpush1.bf16.msra.mxu0 %v694
    %1433 = vmatprep.subr.bf16.mxu0 %v693
    %1434 = vmatpush1.bf16.msra.mxu0 %v692
    %1435 = vmatprep.subr.bf16.mxu0 %v691
    %1436 = vmatpush1.bf16.msra.mxu0 %v690
    %1437 = vmatprep.subr.bf16.mxu0 %v689
    %1438 = vmatpush1.bf16.msra.mxu0 %v688
    %1439 = vmatprep.subr.bf16.mxu0 %v687
    %1440 = vmatpush1.bf16.msra.mxu0 %v686
    %1441 = vmatprep.subr.bf16.mxu0 %v685
    %1442 = vmatpush1.bf16.msra.mxu0 %v684
    %1443 = vmatprep.subr.bf16.mxu0 %v683
    %1444 = vmatpush1.bf16.msra.mxu0 %v682
    %1445 = vmatprep.subr.bf16.mxu0 %v713
    %1446 = vmatpush2.bf16.msra.mxu0 %v712
    %1447 = vmatprep.subr.bf16.mxu0 %v711
    %1448 = vmatpush2.bf16.msra.mxu0 %v710
    %1449 = vmatprep.subr.bf16.mxu0 %v709
    %1450 = vmatpush2.bf16.msra.mxu0 %v708
    %1451 = vmatprep.subr.bf16.mxu0 %v707
    %1452 = vmatpush2.bf16.msra.mxu0 %v706
    %1453 = vmatprep.subr.bf16.mxu0 %v705
    %1454 = vmatpush2.bf16.msra.mxu0 %v704
    %1455 = vmatprep.subr.bf16.mxu0 %v703
    %1456 = vmatpush2.bf16.msra.mxu0 %v702
    %1457 = vmatprep.subr.bf16.mxu0 %v701
    %1458 = vmatpush2.bf16.msra.mxu0 %v700
    %1459 = vmatprep.subr.bf16.mxu0 %v699
    %1460 = vmatpush2.bf16.msra.mxu0 %v698
    %1461 = vmatprep.mubr.bf16.mxu0 %v1258
    %1462 = vmatmul.mubr.bf16.gmra.mxu0 %v1257
    %v1463 = vpop.f32.mrf.mxu0
    %v1464 = vadd.f32 0.0, %v1463
    %v1465 = vpop.f32.mrf.mxu0
    %v1466 = vadd.f32 0.0, %v1465
    %v1467 = vpop.f32.mrf.mxu0
    %v1468 = vpop.f32.mrf.mxu0
    %1469 = vdwg.mxu0
    %1470 = vmatprep.subr.bf16.mxu0 %v729
    %1471 = vmatpush1.bf16.msra.mxu0 %v728
    %1472 = vmatprep.subr.bf16.mxu0 %v727
    %1473 = vmatpush1.bf16.msra.mxu0 %v726
    %1474 = vmatprep.subr.bf16.mxu0 %v725
    %1475 = vmatpush1.bf16.msra.mxu0 %v724
    %1476 = vmatprep.subr.bf16.mxu0 %v723
    %1477 = vmatpush1.bf16.msra.mxu0 %v722
    %1478 = vmatprep.subr.bf16.mxu0 %v721
    %1479 = vmatpush1.bf16.msra.mxu0 %v720
    %1480 = vmatprep.subr.bf16.mxu0 %v719
    %1481 = vmatpush1.bf16.msra.mxu0 %v718
    %1482 = vmatprep.subr.bf16.mxu0 %v717
    %1483 = vmatpush1.bf16.msra.mxu0 %v716
    %1484 = vmatprep.subr.bf16.mxu0 %v715
    %1485 = vmatpush1.bf16.msra.mxu0 %v714
    %1486 = vmatprep.subr.bf16.mxu0 %v745
    %1487 = vmatpush2.bf16.msra.mxu0 %v744
    %1488 = vmatprep.subr.bf16.mxu0 %v743
    %1489 = vmatpush2.bf16.msra.mxu0 %v742
    %1490 = vmatprep.subr.bf16.mxu0 %v741
    %1491 = vmatpush2.bf16.msra.mxu0 %v740
    %1492 = vmatprep.subr.bf16.mxu0 %v739
    %1493 = vmatpush2.bf16.msra.mxu0 %v738
    %1494 = vmatprep.subr.bf16.mxu0 %v737
    %1495 = vmatpush2.bf16.msra.mxu0 %v736
    %1496 = vmatprep.subr.bf16.mxu0 %v735
    %1497 = vmatpush2.bf16.msra.mxu0 %v734
    %1498 = vmatprep.subr.bf16.mxu0 %v733
    %1499 = vmatpush2.bf16.msra.mxu0 %v732
    %1500 = vmatprep.subr.bf16.mxu0 %v731
    %1501 = vmatpush2.bf16.msra.mxu0 %v730
    %1502 = vmatprep.mubr.bf16.mxu0 %v1260
    %1503 = vmatmul.mubr.bf16.gmra.mxu0 %v1259
    %v1504 = vpop.f32.mrf.mxu0
    %v1505 = vadd.f32 %v1464, %v1504
    %v1506 = vpop.f32.mrf.mxu0
    %v1507 = vadd.f32 %v1466, %v1506
    %v1508 = vpop.f32.mrf.mxu0
    %v1509 = vpop.f32.mrf.mxu0
    %1510 = vdwg.mxu0
    %1511 = vmatprep.subr.bf16.mxu0 %v761
    %1512 = vmatpush1.bf16.msra.mxu0 %v760
    %1513 = vmatprep.subr.bf16.mxu0 %v759
    %1514 = vmatpush1.bf16.msra.mxu0 %v758
    %1515 = vmatprep.subr.bf16.mxu0 %v757
    %1516 = vmatpush1.bf16.msra.mxu0 %v756
    %1517 = vmatprep.subr.bf16.mxu0 %v755
    %1518 = vmatpush1.bf16.msra.mxu0 %v754
    %1519 = vmatprep.subr.bf16.mxu0 %v753
    %1520 = vmatpush1.bf16.msra.mxu0 %v752
    %1521 = vmatprep.subr.bf16.mxu0 %v751
    %1522 = vmatpush1.bf16.msra.mxu0 %v750
    %1523 = vmatprep.subr.bf16.mxu0 %v749
    %1524 = vmatpush1.bf16.msra.mxu0 %v748
    %1525 = vmatprep.subr.bf16.mxu0 %v747
    %1526 = vmatpush1.bf16.msra.mxu0 %v746
    %1527 = vmatprep.subr.bf16.mxu0 %v777
    %1528 = vmatpush2.bf16.msra.mxu0 %v776
    %1529 = vmatprep.subr.bf16.mxu0 %v775
    %1530 = vmatpush2.bf16.msra.mxu0 %v774
    %1531 = vmatprep.subr.bf16.mxu0 %v773
    %1532 = vmatpush2.bf16.msra.mxu0 %v772
    %1533 = vmatprep.subr.bf16.mxu0 %v771
    %1534 = vmatpush2.bf16.msra.mxu0 %v770
    %1535 = vmatprep.subr.bf16.mxu0 %v769
    %1536 = vmatpush2.bf16.msra.mxu0 %v768
    %1537 = vmatprep.subr.bf16.mxu0 %v767
    %1538 = vmatpush2.bf16.msra.mxu0 %v766
    %1539 = vmatprep.subr.bf16.mxu0 %v765
    %1540 = vmatpush2.bf16.msra.mxu0 %v764
    %1541 = vmatprep.subr.bf16.mxu0 %v763
    %1542 = vmatpush2.bf16.msra.mxu0 %v762
    %1543 = vmatprep.mubr.bf16.mxu0 %v1262
    %1544 = vmatmul.mubr.bf16.gmra.mxu0 %v1261
    %v1545 = vpop.f32.mrf.mxu0
    %v1546 = vadd.f32 %v1505, %v1545
    %v1547 = vpop.f32.mrf.mxu0
    %v1548 = vadd.f32 %v1507, %v1547
    %v1549 = vpop.f32.mrf.mxu0
    %v1550 = vpop.f32.mrf.mxu0
    %1551 = vdwg.mxu0
    %1552 = vmatprep.subr.bf16.mxu0 %v793
    %1553 = vmatpush1.bf16.msra.mxu0 %v792
    %1554 = vmatprep.subr.bf16.mxu0 %v791
    %1555 = vmatpush1.bf16.msra.mxu0 %v790
    %1556 = vmatprep.subr.bf16.mxu0 %v789
    %1557 = vmatpush1.bf16.msra.mxu0 %v788
    %1558 = vmatprep.subr.bf16.mxu0 %v787
    %1559 = vmatpush1.bf16.msra.mxu0 %v786
    %1560 = vmatprep.subr.bf16.mxu0 %v785
    %1561 = vmatpush1.bf16.msra.mxu0 %v784
    %1562 = vmatprep.subr.bf16.mxu0 %v783
    %1563 = vmatpush1.bf16.msra.mxu0 %v782
    %1564 = vmatprep.subr.bf16.mxu0 %v781
    %1565 = vmatpush1.bf16.msra.mxu0 %v780
    %1566 = vmatprep.subr.bf16.mxu0 %v779
    %1567 = vmatpush1.bf16.msra.mxu0 %v778
    %1568 = vmatprep.subr.bf16.mxu0 %v809
    %1569 = vmatpush2.bf16.msra.mxu0 %v808
    %1570 = vmatprep.subr.bf16.mxu0 %v807
    %1571 = vmatpush2.bf16.msra.mxu0 %v806
    %1572 = vmatprep.subr.bf16.mxu0 %v805
    %1573 = vmatpush2.bf16.msra.mxu0 %v804
    %1574 = vmatprep.subr.bf16.mxu0 %v803
    %1575 = vmatpush2.bf16.msra.mxu0 %v802
    %1576 = vmatprep.subr.bf16.mxu0 %v801
    %1577 = vmatpush2.bf16.msra.mxu0 %v800
    %1578 = vmatprep.subr.bf16.mxu0 %v799
    %1579 = vmatpush2.bf16.msra.mxu0 %v798
    %1580 = vmatprep.subr.bf16.mxu0 %v797
    %1581 = vmatpush2.bf16.msra.mxu0 %v796
    %1582 = vmatprep.subr.bf16.mxu0 %v795
    %1583 = vmatpush2.bf16.msra.mxu0 %v794
    %1584 = vmatprep.mubr.bf16.mxu0 %v1264
    %1585 = vmatmul.mubr.bf16.gmra.mxu0 %v1263
    %v1586 = vpop.f32.mrf.mxu0
    %v1587 = vadd.f32 %v1546, %v1586
    %v1588 = vpop.f32.mrf.mxu0
    %v1589 = vadd.f32 %v1548, %v1588
    %v1590 = vpop.f32.mrf.mxu0
    %v1591 = vpop.f32.mrf.mxu0
    %1592 = vdwg.mxu0
    %v1593 = vsub.f32 %v234, %v1125
    %v1594 = vsub.f32 %v1148, %v234
    %v1595 = vmul.f32 %v1593, %v1423
    %v1596 = vsel %vm1102, %v1595, 0.0
    %v1597 = vrot.slane %v1596, 4
    %v1598 = vadd.f32 %v1596, %v1597
    %v1599 = vrot.slane %v1598, 2
    %v1600 = vadd.f32 %v1598, %v1599
    %v1601 = vrot.slane %v1600, 1
    %v1602 = vadd.f32 %v1600, %v1601
    %v1603 = vmul.f32 %v1594, %v1425
    %v1604 = vsel %vm1102, %v1603, 0.0
    %v1605 = vrot.slane %v1604, 4
    %v1606 = vadd.f32 %v1604, %v1605
    %v1607 = vrot.slane %v1606, 2
    %v1608 = vadd.f32 %v1606, %v1607
    %v1609 = vrot.slane %v1608, 1
    %v1610 = vadd.f32 %v1608, %v1609
    %v1611 = vadd.f32 %v1602, %v1610
    %v1612 = vmul.f32 %v1611, 0.5
    %v1613 = vmul.f32 %v1593, %v1587
    %v1614 = vsel %vm1102, %v1613, 0.0
    %v1615 = vrot.slane %v1614, 4
    %v1616 = vadd.f32 %v1614, %v1615
    %v1617 = vrot.slane %v1616, 2
    %v1618 = vadd.f32 %v1616, %v1617
    %v1619 = vrot.slane %v1618, 1
    %v1620 = vadd.f32 %v1618, %v1619
    %v1621 = vmul.f32 %v1594, %v1589
    %v1622 = vsel %vm1102, %v1621, 0.0
    %v1623 = vrot.slane %v1622, 4
    %v1624 = vadd.f32 %v1622, %v1623
    %v1625 = vrot.slane %v1624, 2
    %v1626 = vadd.f32 %v1624, %v1625
    %v1627 = vrot.slane %v1626, 1
    %v1628 = vadd.f32 %v1626, %v1627
    %v1629 = vadd.f32 %v1620, %v1628
    %v1630 = vmul.f32 %v1629, 0.5
    %p1631 = scmp.eq.s32.totalorder 0, 0
    // Predicated region
    $region26: #{differentiable_auto_aug_forward.1} parent=1 // pred_check
      %p1632 = pneg %p1631
    $region27: #{differentiable_auto_aug_forward.1} parent=1 // pred_check_branch
      %1634 = sbr.rel (%p1632) target = $region29
    $region28: #{differentiable_auto_aug_forward.1} parent=1 // pred_region
      %1635 = vst [vmem:[#allocation2] sm:$0x1] 0.0
      %1636 = vst [vmem:[#allocation3] sm:$0x1] 0.0
      %1637 = vst [vmem:[#allocation4] sm:$0x1] 0.0
    $region29: #{differentiable_auto_aug_forward.1} parent=1 // pred_fallthru
      _
    %v1638 = vld [vmem:[#allocation2] sm:$0x1]
    %v1639 = vadd.f32 %v1638, %v1150
    %1640 = vst [vmem:[#allocation2] sm:$0x1] %v1639
    %v1641 = vld [vmem:[#allocation3] sm:$0x1]
    %v1642 = vadd.f32 %v1641, %v1612
    %1643 = vst [vmem:[#allocation3] sm:$0x1] %v1642
    %v1644 = vld [vmem:[#allocation4] sm:$0x1]
    %v1645 = vadd.f32 %v1644, %v1630
    %1646 = vst [vmem:[#allocation4] sm:$0x1] %v1645
    // Predicated region
    $region30: #{differentiable_auto_aug_forward.1} parent=1 // pred_check
      %p1647 = pneg %p1631
    $region31: #{differentiable_auto_aug_forward.1} parent=1 // pred_check_branch
      %1649 = sbr.rel (%p1647) target = $region33
    $region32: #{differentiable_auto_aug_forward.1} parent=1 // pred_region
      %v1650 = vld [vmem:[#allocation2] sm:$0x1]
      %v1651 = vld [vmem:[#allocation3] sm:$0x1]
      %v1652 = vld [vmem:[#allocation4] sm:$0x1]
      %v1654 = vlaneseq
      %v1655 = vshrl.u32 %v1654, 7
      %v1656 = vsub.s32 0, %v1655
      %v1657 = vrot.slane %v1651, %v1656
      %v1660 = vlaneseq
      %v1661 = vshrl.u32 %v1660, 7
      %v1662 = vsub.s32 0, %v1661
      %v1663 = vrot.slane %v1652, %v1662
      %vm1665 = vcmask 1040384
      %v1666 = vsel %vm1665, %v1650, %v1657
      %v1667 = vsel %vm1102, %v1666, %v1663
      %1668 = vst [vmem:[%s6] sm:$0x7] %v1667
    $region33: #{differentiable_auto_aug_forward.1} parent=1 // pred_fallthru
      _
    %s1669 = sadd.s32 0, 0
    %p1670 = scmp.lt.s32.totalorder %s1669, 0
    %s1671 = scalar_select %p1670, %s1669, 0
    %s1672 = smul.addr %s1671, 8
    %s1673 = smul.addr %s1672, 2
    %s1674 = scalar_lea.vmem %s5, %s1673
    // Predicated region
    $region34: #{differentiable_auto_aug_forward.1} parent=1 // pred_check
      _
    $region35: #{differentiable_auto_aug_forward.1} parent=1 // pred_check_branch
      %1676 = sbr.rel (0) target = $region37
    $region36: #{differentiable_auto_aug_forward.1} parent=1 // pred_region
      %s1677 = sadd.s32 0, 0
    $region37: #{differentiable_auto_aug_forward.1} parent=1 // pred_fallthru
      _
    // Predicated region
    $region38: #{differentiable_auto_aug_forward.1} parent=1 // pred_check
      _
    $region39: #{differentiable_auto_aug_forward.1} parent=1 // pred_check_branch
      %1679 = sbr.rel (0) target = $region41
    $region40: #{differentiable_auto_aug_forward.1} parent=1 // pred_region
      _
    $region41: #{differentiable_auto_aug_forward.1} parent=1 // pred_fallthru
      _
    // Predicated region
    $region42: #{differentiable_auto_aug_forward.1} parent=1 // pred_check
      _
    $region43: #{differentiable_auto_aug_forward.1} parent=1 // pred_check_branch
      %1681 = sbr.rel (0) target = $region45
    $region44: #{differentiable_auto_aug_forward.1} parent=1 // pred_region
      %s1682 = sadd.s32 0, 0
      %p1683 = scmp.lt.s32.totalorder %s1682, 0
      %s1684 = scalar_select %p1683, %s1682, 0
      %s1685 = smul.addr %s1684, 8
      %s1686 = smul.addr %s1685, 2
      %s1687 = scalar_lea.vmem %s5, %s1686
    $region45: #{differentiable_auto_aug_forward.1} parent=1 // pred_fallthru
      _
    // Predicated region
    $region46: #{differentiable_auto_aug_forward.1} parent=1 // pred_check
      _
    $region47: #{differentiable_auto_aug_forward.1} parent=1 // pred_check_branch
      %1689 = sbr.rel (0) target = $region49
    $region48: #{differentiable_auto_aug_forward.1} parent=1 // pred_region
      _
    $region49: #{differentiable_auto_aug_forward.1} parent=1 // pred_fallthru
      _
    %1690 = vsyncpa [#allocation6], 1

</llo_original>
